<compile_context>
chip_gen: v7x
topology: tpu7x:2x2x1
jax: 0.10.0
libtpu: 0.0.40
codegen_flags: <defaults>
</compile_context>

<pallas_src>
import jax
import jax.numpy as jnp
from jax.experimental import pallas as pl
from jax.experimental.pallas import tpu as pltpu

EPS = 1e-5
HIDDEN = (128, 256, 256, 128)   # hidden-layer widths of the QNetwork


def _round_up(n, m):
    return (n + m - 1) // m * m


# ---------------------------------------------------------------------------
# Kernel
# ---------------------------------------------------------------------------
def _make_qnet_kernel(meta):
    """meta: per layer (row_off, rows, col_off, cols) -- static slab coordinates."""
    n_layers = len(meta)

    def kernel(x_ref, w_ref, c_ref, out_ref):
        # x arrives f32; cast to bf16 in-kernel (full-rate MXU path, no host op).
        h = x_ref[...].astype(jnp.bfloat16)
        for li, (r_off, rows, c_off, cols) in enumerate(meta):
            w = w_ref[r_off:r_off + rows, 0:cols]      # bf16, tile-aligned static slice
            c = c_ref[:, c_off:c_off + cols]           # f32, lane-aligned static slice
            y = jnp.dot(h, w, preferred_element_type=jnp.float32) + c
            if li < n_layers - 1:
                # ReLU; Dropout(0.2) is identity in eval mode.
                h = jnp.maximum(y, 0.0).astype(jnp.bfloat16)
            else:
                out_ref[...] = y                       # lane-dense (TB, 128) f32 store

    return kernel


# ---------------------------------------------------------------------------
# Host-side parameter construction / folding / packing
# ---------------------------------------------------------------------------
def init_params(key, input_dim, output_dim):
    """Deterministic synthetic parameters matching QNetwork.__init__ (PyTorch-style, f32)."""
    dims = [(input_dim, 128), (128, 256), (256, 256), (256, 128), (128, output_dim)]
    params = []
    for i, (fan_in, fan_out) in enumerate(dims):
        key, kw, kb, kg, kbeta, km, kv = jax.random.split(key, 7)
        bound = 1.0 / jnp.sqrt(fan_in)
        w = jax.random.uniform(kw, (fan_in, fan_out), jnp.float32, -bound, bound)
        b = jax.random.uniform(kb, (1, fan_out), jnp.float32, -bound, bound)
        if i < 4:  # hidden layers have BatchNorm1d
            gamma = 1.0 + 0.1 * jax.random.normal(kg, (1, fan_out), jnp.float32)
            beta = 0.1 * jax.random.normal(kbeta, (1, fan_out), jnp.float32)
            r_mean = 0.1 * jax.random.normal(km, (1, fan_out), jnp.float32)
            r_var = 1.0 + 0.1 * jax.random.uniform(kv, (1, fan_out), jnp.float32)
            params.append((w, b, gamma, beta, r_mean, r_var))
        else:
            params.append((w, b))
    return params


def fold_and_pack(raw_params):
    """Fold BN(eval)+bias into each Linear:  W' = W*scale,  c' = b*scale + shift,
    then pack all five W' into one bf16 slab and all five c' into one f32 row.

    Returns (w_slab[bf16], c_row[f32], meta, out_dim, out_p).
    """
    in_dim = raw_params[0][0].shape[0]
    out_dim = raw_params[-1][0].shape[1]
    in_p = _round_up(in_dim, 16)       # 16-row alignment -> bf16 tile-aligned slab offsets
    out_p = _round_up(out_dim, 128)    # lane-dense final store (padded cols are zero)

    folded = []
    for i, p in enumerate(raw_params):
        if i < 4:   # hidden: Linear + BatchNorm1d (eval)
            w, b, gamma, beta, r_mean, r_var = p
            scale = gamma / jnp.sqrt(r_var + EPS)          # (1, F)
            shift = beta - r_mean * scale                  # (1, F)
            folded.append((w * scale, b * scale + shift))
        else:       # output: plain Linear
            w, b = p
            folded.append((w, b))

    row_heights = (in_p,) + HIDDEN                 # slab row extents per layer
    col_widths = HIDDEN + (out_p,)                 # slab / bias column extents per layer
    total_rows = sum(row_heights)
    max_cols = max(col_widths)

    w_slab = jnp.zeros((total_rows, max_cols), jnp.float32)
    c_row = jnp.zeros((1, sum(col_widths)), jnp.float32)

    meta = []
    r_off = 0
    c_off = 0
    for (w_f, c), rows, cols in zip(folded, row_heights, col_widths):
        rw, cw = w_f.shape
        w_slab = w_slab.at[r_off:r_off + rw, 0:cw].set(w_f)
        c_row = c_row.at[:, c_off:c_off + cw].set(c)
        # kernel slices `rw` rows (actual fan-in) and `cols` columns (padded fan-out)
        meta.append((r_off, int(rw), c_off, int(cols)))
        r_off += rows
        c_off += cols

    return (w_slab.astype(jnp.bfloat16), c_row.astype(jnp.float32),
            tuple(meta), int(out_dim), int(out_p))


# ---------------------------------------------------------------------------
# Wrapper
# ---------------------------------------------------------------------------
def qnetwork_forward(x, packed, *, block_b=512):
    """x: (B, in_dim) f32.  Returns (B, out_dim) f32."""
    w_slab, c_row, meta, out_dim, out_p = packed
    B, in_dim = x.shape

    # One grid step whenever the whole batch fits a single tile (this kernel is
    # per-grid-step-overhead bound, not VMEM/MXU bound); otherwise 512-row tiles
    # (multiple of 8) with a ragged, Pallas-masked last block.  With >=2 steps,
    # "parallel" lets v7x shard batch tiles across its two TensorCores.
    TB = B if B <= block_b else block_b
    grid = (pl.cdiv(B, TB),)

    kernel = _make_qnet_kernel(meta)

    flops = 2 * B * sum(r * c for (_, r, _, c) in meta)
    bytes_accessed = (int(w_slab.size) * 2 + int(c_row.size) * 4
                      + B * in_dim * 4 + B * out_p * 4)

    out = pl.pallas_call(
        kernel,
        out_shape=jax.ShapeDtypeStruct((B, out_p), jnp.float32),
        grid_spec=pltpu.PrefetchScalarGridSpec(
            num_scalar_prefetch=0,
            grid=grid,
            in_specs=[
                pl.BlockSpec((TB, in_dim), lambda i: (i, 0)),
                # Packed params: full-array blocks with constant index_map ->
                # VMEM-resident across all batch-grid steps (DMA'd once).
                pl.BlockSpec(w_slab.shape, lambda i: (0, 0)),
                pl.BlockSpec(c_row.shape, lambda i: (0, 0)),
            ],
            out_specs=pl.BlockSpec((TB, out_p), lambda i: (i, 0)),
        ),
        compiler_params=pltpu.CompilerParams(
            dimension_semantics=("parallel",),   # megacore sharding on v7x
        ),
        cost_estimate=pl.CostEstimate(
            flops=flops, transcendentals=0, bytes_accessed=bytes_accessed),
    )(x, w_slab, c_row)

    # Padded output columns are exactly zero (zero-padded W5/b5); slice them off.
    return out[:, :out_dim]


# ---------------------------------------------------------------------------
# Pure-JAX reference (f32, eval mode) matching the PyTorch module
# ---------------------------------------------------------------------------
def qnetwork_reference(x, raw_params):
    h = x
    for i, p in enumerate(raw_params):
        if i < 4:
            w, b, gamma, beta, r_mean, r_var = p
            y = h @ w + b
            y = (y - r_mean) / jnp.sqrt(r_var + EPS) * gamma + beta
            h = jnp.maximum(y, 0.0)   # Dropout(0.2) is identity in eval mode
        else:
            w, b = p
            h = h @ w + b
    return h


if __name__ == "__main__":
    key = jax.random.PRNGKey(0)
    k_x, k_p = jax.random.split(key)

    B, INPUT_DIM, OUTPUT_DIM = 200, 16, 4
    x = jax.random.normal(k_x, (B, INPUT_DIM), jnp.float32)

    raw_params = init_params(k_p, INPUT_DIM, OUTPUT_DIM)
    packed = fold_and_pack(raw_params)

    out = qnetwork_forward(x, packed, block_b=512)   # B=200 -> single grid step
    out = jax.block_until_ready(out)

    ref = qnetwork_reference(x, raw_params)
    assert out.shape == (B, OUTPUT_DIM), out.shape
    # bf16 weights/activations inside the kernel vs f32 reference -> modest tolerance.
    assert jnp.allclose(out, ref, atol=5e-2, rtol=5e-2), float(jnp.max(jnp.abs(out - ref)))

    print("KERNEL_OK")
</pallas_src>

<mosaic_0001>
module attributes {stable_mosaic.version = 11 : i64} {
  func.func @kernel(%arg0: i32, %arg1: memref<200x16xf32, #tpu.memory_space<vmem>>, %arg2: memref<784x256xbf16, #tpu.memory_space<vmem>>, %arg3: memref<1x896xf32, #tpu.memory_space<vmem>>, %arg4: memref<200x128xf32, #tpu.memory_space<vmem>>) attributes {dimension_semantics = [#tpu.dimension_semantics<parallel>], iteration_bounds = array<i64: 1>, scalar_prefetch = 0 : i64, scratch_operands = 0 : i64, tpu.core_type = #tpu.core_type<tc>, window_params = [{transform_indices = @transform_0, window_bounds = array<i64: 200, 16>}, {pipeline_mode = #tpu.pipeline_mode<synchronous>, transform_indices = @transform_1, window_bounds = array<i64: 784, 256>}, {pipeline_mode = #tpu.pipeline_mode<synchronous>, transform_indices = @transform_2, window_bounds = array<i64: 1, 896>}, {transform_indices = @transform_3, window_bounds = array<i64: 200, 128>}]} {
    %c0 = arith.constant 0 : index
    %c0_0 = arith.constant 0 : index
    %0 = vector.load %arg1[%c0, %c0_0] : memref<200x16xf32, #tpu.memory_space<vmem>>, vector<200x16xf32>
    %1 = arith.truncf %0 : vector<200x16xf32> to vector<200x16xbf16>
    %c0_1 = arith.constant 0 : index
    %c0_2 = arith.constant 0 : index
    %2 = vector.load %arg2[%c0_1, %c0_2] : memref<784x256xbf16, #tpu.memory_space<vmem>>, vector<16x128xbf16>
    %c0_3 = arith.constant 0 : index
    %c0_4 = arith.constant 0 : index
    %3 = vector.load %arg3[%c0_3, %c0_4] : memref<1x896xf32, #tpu.memory_space<vmem>>, vector<1x128xf32>
    %cst = arith.constant dense<0.000000e+00> : vector<200x128xf32>
    %4 = tpu.matmul %1, %2, %cst {dimension_numbers = #tpu.dot_dimension_numbers<[1], [0], [0], [1], [0, 0, 1, 1], [], []>} : vector<200x16xbf16>, vector<16x128xbf16>, vector<200x128xf32> -> vector<200x128xf32>
    %5 = vector.broadcast %3 : vector<1x128xf32> to vector<200x128xf32>
    %6 = arith.addf %4, %5 : vector<200x128xf32>
    %cst_5 = arith.constant 0.000000e+00 : f32
    %7 = vector.broadcast %cst_5 : f32 to vector<200x128xf32>
    %8 = arith.maximumf %6, %7 : vector<200x128xf32>
    %9 = arith.truncf %8 : vector<200x128xf32> to vector<200x128xbf16>
    %c16 = arith.constant 16 : index
    %c0_6 = arith.constant 0 : index
    %10 = vector.load %arg2[%c16, %c0_6] : memref<784x256xbf16, #tpu.memory_space<vmem>>, vector<128x256xbf16>
    %c0_7 = arith.constant 0 : index
    %c128 = arith.constant 128 : index
    %11 = vector.load %arg3[%c0_7, %c128] : memref<1x896xf32, #tpu.memory_space<vmem>>, vector<1x256xf32>
    %cst_8 = arith.constant dense<0.000000e+00> : vector<200x256xf32>
    %12 = tpu.matmul %9, %10, %cst_8 {dimension_numbers = #tpu.dot_dimension_numbers<[1], [0], [0], [1], [0, 0, 1, 1], [], []>} : vector<200x128xbf16>, vector<128x256xbf16>, vector<200x256xf32> -> vector<200x256xf32>
    %13 = vector.broadcast %11 : vector<1x256xf32> to vector<200x256xf32>
    %14 = arith.addf %12, %13 : vector<200x256xf32>
    %cst_9 = arith.constant 0.000000e+00 : f32
    %15 = vector.broadcast %cst_9 : f32 to vector<200x256xf32>
    %16 = arith.maximumf %14, %15 : vector<200x256xf32>
    %17 = arith.truncf %16 : vector<200x256xf32> to vector<200x256xbf16>
    %c144 = arith.constant 144 : index
    %c0_10 = arith.constant 0 : index
    %18 = vector.load %arg2[%c144, %c0_10] : memref<784x256xbf16, #tpu.memory_space<vmem>>, vector<256x256xbf16>
    %c0_11 = arith.constant 0 : index
    %c384 = arith.constant 384 : index
    %19 = vector.load %arg3[%c0_11, %c384] : memref<1x896xf32, #tpu.memory_space<vmem>>, vector<1x256xf32>
    %cst_12 = arith.constant dense<0.000000e+00> : vector<200x256xf32>
    %20 = tpu.matmul %17, %18, %cst_12 {dimension_numbers = #tpu.dot_dimension_numbers<[1], [0], [0], [1], [0, 0, 1, 1], [], []>} : vector<200x256xbf16>, vector<256x256xbf16>, vector<200x256xf32> -> vector<200x256xf32>
    %21 = vector.broadcast %19 : vector<1x256xf32> to vector<200x256xf32>
    %22 = arith.addf %20, %21 : vector<200x256xf32>
    %cst_13 = arith.constant 0.000000e+00 : f32
    %23 = vector.broadcast %cst_13 : f32 to vector<200x256xf32>
    %24 = arith.maximumf %22, %23 : vector<200x256xf32>
    %25 = arith.truncf %24 : vector<200x256xf32> to vector<200x256xbf16>
    %c400 = arith.constant 400 : index
    %c0_14 = arith.constant 0 : index
    %26 = vector.load %arg2[%c400, %c0_14] : memref<784x256xbf16, #tpu.memory_space<vmem>>, vector<256x128xbf16>
    %c0_15 = arith.constant 0 : index
    %c640 = arith.constant 640 : index
    %27 = vector.load %arg3[%c0_15, %c640] : memref<1x896xf32, #tpu.memory_space<vmem>>, vector<1x128xf32>
    %cst_16 = arith.constant dense<0.000000e+00> : vector<200x128xf32>
    %28 = tpu.matmul %25, %26, %cst_16 {dimension_numbers = #tpu.dot_dimension_numbers<[1], [0], [0], [1], [0, 0, 1, 1], [], []>} : vector<200x256xbf16>, vector<256x128xbf16>, vector<200x128xf32> -> vector<200x128xf32>
    %29 = vector.broadcast %27 : vector<1x128xf32> to vector<200x128xf32>
    %30 = arith.addf %28, %29 : vector<200x128xf32>
    %cst_17 = arith.constant 0.000000e+00 : f32
    %31 = vector.broadcast %cst_17 : f32 to vector<200x128xf32>
    %32 = arith.maximumf %30, %31 : vector<200x128xf32>
    %33 = arith.truncf %32 : vector<200x128xf32> to vector<200x128xbf16>
    %c656 = arith.constant 656 : index
    %c0_18 = arith.constant 0 : index
    %34 = vector.load %arg2[%c656, %c0_18] : memref<784x256xbf16, #tpu.memory_space<vmem>>, vector<128x128xbf16>
    %c0_19 = arith.constant 0 : index
    %c768 = arith.constant 768 : index
    %35 = vector.load %arg3[%c0_19, %c768] : memref<1x896xf32, #tpu.memory_space<vmem>>, vector<1x128xf32>
    %cst_20 = arith.constant dense<0.000000e+00> : vector<200x128xf32>
    %36 = tpu.matmul %33, %34, %cst_20 {dimension_numbers = #tpu.dot_dimension_numbers<[1], [0], [0], [1], [0, 0, 1, 1], [], []>} : vector<200x128xbf16>, vector<128x128xbf16>, vector<200x128xf32> -> vector<200x128xf32>
    %37 = vector.broadcast %35 : vector<1x128xf32> to vector<200x128xf32>
    %38 = arith.addf %36, %37 : vector<200x128xf32>
    %c0_21 = arith.constant 0 : index
    %c0_22 = arith.constant 0 : index
    %39 = vector.load %arg4[%c0_21, %c0_22] : memref<200x128xf32, #tpu.memory_space<vmem>>, vector<200x128xf32>
    tpu.vector_store %arg4[%c0_21, %c0_22], %38 {strides = array<i32>} : memref<200x128xf32, #tpu.memory_space<vmem>>, vector<200x128xf32>,
    return
  }
  func.func @transform_0(%arg0: i32) -> (i32, i32) {
    %c0_i32 = arith.constant 0 : i32
    %c0_i32_0 = arith.constant 0 : i32
    return %arg0, %c0_i32 : i32, i32
  }
  func.func @transform_1(%arg0: i32) -> (i32, i32) {
    %c0_i32 = arith.constant 0 : i32
    %c0_i32_0 = arith.constant 0 : i32
    %c0_i32_1 = arith.constant 0 : i32
    return %c0_i32, %c0_i32_0 : i32, i32
  }
  func.func @transform_2(%arg0: i32) -> (i32, i32) {
    %c0_i32 = arith.constant 0 : i32
    %c0_i32_0 = arith.constant 0 : i32
    %c0_i32_1 = arith.constant 0 : i32
    return %c0_i32, %c0_i32_0 : i32, i32
  }
  func.func @transform_3(%arg0: i32) -> (i32, i32) {
    %c0_i32 = arith.constant 0 : i32
    %c0_i32_0 = arith.constant 0 : i32
    return %arg0, %c0_i32 : i32, i32
  }
}

</mosaic_0001>

<llo_original>
// kernel: tpu_custom_call.1
$region0: #{tpu_custom_call.1}
  #allocation0 [shape = 'u32[]', space=smem, size = 0x4, offset = 0x4, fixed_abs, tag = 'smem constant byte address 0x4 - core index']
  #allocation1 [shape = 'u32[144,128]{1,0:T(1,128)}', space=vmem, size = 0x12000, scoped, tag = 'internal scratch']
  %s0 = inlined_call_operand.vmem [shape: f32[200,16], index: 0, kind: input, shape index: {}]
  %s1 = inlined_call_operand.hbm [shape: bf16[784,256], index: 1, kind: input, shape index: {}]
  %s2 = inlined_call_operand.vmem [shape: f32[1,896], index: 2, kind: input, shape index: {}]
  %s3 = inlined_call_operand.hbm [shape: f32[200,128], index: 3, kind: output, shape index: {}]
  %s4 = sld [smem:[#allocation0]]
  $region26: #{tpu_custom_call.1} parent=0
    _
  %s6 = ssub.s32 1, %s4
  %s7 = scalar_select 0, %s6, %s4
  $region1: #{tpu_custom_call.1} parent=0
    #allocation2 [shape = 'u8[401408]{0}', space=vmem, size = 0x62000, scoped, tag = 'input window, operand 1, single buffered']
    #allocation3 [shape = 's32[1]{0}', space=sflag, size = 0x4, scoped, tag = 'scoped memory for tpu_custom_call.1']
    #allocation4 [shape = 's32[1]{0}', space=sflag, size = 0x4, scoped, tag = 'scoped memory for tpu_custom_call.1']
    #allocation5 [shape = 'u8[102400]{0}', space=vmem, size = 0x19000, scoped, tag = 'output window, operand 0, single buffered']
    %8 = vsyncpa [#allocation3], 0
    %9 = vsyncpa [#allocation4], 0
    // Predicated region
    $region2: #{tpu_custom_call.1} parent=1 // pred_check
      _
    $region3: #{tpu_custom_call.1} parent=1 // pred_check_branch
      %11 = sbr.rel (0) target = $region5
    $region4: #{tpu_custom_call.1} parent=1 // pred_region
      _
    $region5: #{tpu_custom_call.1} parent=1 // pred_fallthru
      _
    // Predicated region
    $region6: #{tpu_custom_call.1} parent=1 // pred_check
      _
    $region7: #{tpu_custom_call.1} parent=1 // pred_check_branch
      %13 = sbr.rel (0) target = $region9
    $region8: #{tpu_custom_call.1} parent=1 // pred_region
      %s15 = ssub.s32 12544, 12544
      %16 = vsyncadd [#allocation3], %s15
      %s17 = sshll.u32 [#allocation2], 4
      %s18 = int_to_ptr.vmem [resolvable:$true] %s17
      %23 = dma.hbm_to_vmem [thread:$0]  %s1, 12544, %s18, [#allocation3], 128, 128, 8
    $region9: #{tpu_custom_call.1} parent=1 // pred_fallthru
      _
    // Predicated region
    $region10: #{tpu_custom_call.1} parent=1 // pred_check
      _
    $region11: #{tpu_custom_call.1} parent=1 // pred_check_branch
      %25 = sbr.rel (0) target = $region13
    $region12: #{tpu_custom_call.1} parent=1 // pred_region
      _
    $region13: #{tpu_custom_call.1} parent=1 // pred_fallthru
      _
    // Predicated region
    $region14: #{tpu_custom_call.1} parent=1 // pred_check
      _
    $region15: #{tpu_custom_call.1} parent=1 // pred_check_branch
      %27 = sbr.rel (0) target = $region17
    $region16: #{tpu_custom_call.1} parent=1 // pred_region
      %28 = dma.done [#allocation3], 12544
    $region17: #{tpu_custom_call.1} parent=1 // pred_fallthru
      _
    %v30 = vld [vmem:[%s0] sm:$0xff]
    %v31 = vld [vmem:[%s0 + $0x8] sm:$0xff]
    %v32 = vld [vmem:[%s0 + $0x10] sm:$0xff]
    %v33 = vld [vmem:[%s0 + $0x18] sm:$0xff]
    %v34 = vld [vmem:[%s0 + $0x20] sm:$0xff]
    %v35 = vld [vmem:[%s0 + $0x28] sm:$0xff]
    %v36 = vld [vmem:[%s0 + $0x30] sm:$0xff]
    %v37 = vld [vmem:[%s0 + $0x38] sm:$0xff]
    %v38 = vld [vmem:[%s0 + $0x40] sm:$0xff]
    %v39 = vld [vmem:[%s0 + $0x48] sm:$0xff]
    %v40 = vld [vmem:[%s0 + $0x50] sm:$0xff]
    %v41 = vld [vmem:[%s0 + $0x58] sm:$0xff]
    %v42 = vld [vmem:[%s0 + $0x60] sm:$0xff]
    %v43 = vld [vmem:[%s0 + $0x68] sm:$0xff]
    %v44 = vld [vmem:[%s0 + $0x70] sm:$0xff]
    %v45 = vld [vmem:[%s0 + $0x78] sm:$0xff]
    %v46 = vld [vmem:[%s0 + $0x80] sm:$0xff]
    %v47 = vld [vmem:[%s0 + $0x88] sm:$0xff]
    %v48 = vld [vmem:[%s0 + $0x90] sm:$0xff]
    %v49 = vld [vmem:[%s0 + $0x98] sm:$0xff]
    %v50 = vld [vmem:[%s0 + $0xa0] sm:$0xff]
    %v51 = vld [vmem:[%s0 + $0xa8] sm:$0xff]
    %v52 = vld [vmem:[%s0 + $0xb0] sm:$0xff]
    %v53 = vld [vmem:[%s0 + $0xb8] sm:$0xff]
    %v54 = vld [vmem:[%s0 + $0xc0] sm:$0xff]
    %v55 = vpack.c.bf16 %v31, %v30
    %v56 = vpack.c.bf16 %v33, %v32
    %v57 = vpack.c.bf16 %v35, %v34
    %v58 = vpack.c.bf16 %v37, %v36
    %v59 = vpack.c.bf16 %v39, %v38
    %v60 = vpack.c.bf16 %v41, %v40
    %v61 = vpack.c.bf16 %v43, %v42
    %v62 = vpack.c.bf16 %v45, %v44
    %v63 = vpack.c.bf16 %v47, %v46
    %v64 = vpack.c.bf16 %v49, %v48
    %v65 = vpack.c.bf16 %v51, %v50
    %v66 = vpack.c.bf16 %v53, %v52
    %v67 = vpack.c.bf16 %v54, %v54
    %v68 = vld [vmem:[#allocation2] sm:$0xf]
    %v69 = vld [vmem:[#allocation2 + $0x8] sm:$0xf]
    %v70 = vld [vmem:[%s2] sm:$0x1]
    %v72 = vlaneseq
    %v73 = vshrl.u32 %v72, 7
    %v74 = vsub.s32 0, %v73
    %v75 = vrot.slane %v70, %v74
    %v79 = vunpack.c.l.b16 %v68
    %v80 = vunpack.c.l.b16 %v69
    %v81 = vpack.c.b16 %v80, %v79
    %vm83 = vcmask 130048
    %v85 = vsel %vm83, %v55, 0
    %v88 = vsel %vm83, %v56, 0
    %v91 = vsel %vm83, %v57, 0
    %v94 = vsel %vm83, %v58, 0
    %v97 = vsel %vm83, %v59, 0
    %v100 = vsel %vm83, %v60, 0
    %v103 = vsel %vm83, %v61, 0
    %v106 = vsel %vm83, %v62, 0
    %v109 = vsel %vm83, %v63, 0
    %v112 = vsel %vm83, %v64, 0
    %v115 = vsel %vm83, %v65, 0
    %v118 = vsel %vm83, %v66, 0
    %v121 = vsel %vm83, %v67, 0
    %123 = vmatprep.subr.bf16.mxu0 0
    %124 = vmatpush1.bf16.msra.mxu0 %v81
    %125 = vmatprep.subr.bf16.mxu0 0
    %126 = vmatpush1.bf16.msra.mxu0 0
    %127 = vmatprep.subr.bf16.mxu0 0
    %128 = vmatpush1.bf16.msra.mxu0 0
    %129 = vmatprep.subr.bf16.mxu0 0
    %130 = vmatpush1.bf16.msra.mxu0 0
    %131 = vmatprep.subr.bf16.mxu0 0
    %132 = vmatpush1.bf16.msra.mxu0 0
    %133 = vmatprep.subr.bf16.mxu0 0
    %134 = vmatpush1.bf16.msra.mxu0 0
    %135 = vmatprep.subr.bf16.mxu0 0
    %136 = vmatpush1.bf16.msra.mxu0 0
    %137 = vmatprep.subr.bf16.mxu0 0
    %138 = vmatpush1.bf16.msra.mxu0 0
    %139 = vmatprep.subr.bf16.mxu0 0
    %140 = vmatpush1.bf16.msra.mxu0 0
    %141 = vmatprep.subr.bf16.mxu0 0
    %142 = vmatpush1.bf16.msra.mxu0 0
    %143 = vmatprep.subr.bf16.mxu0 0
    %144 = vmatpush1.bf16.msra.mxu0 0
    %145 = vmatprep.subr.bf16.mxu0 0
    %146 = vmatpush1.bf16.msra.mxu0 0
    %147 = vmatprep.subr.bf16.mxu0 0
    %148 = vmatpush1.bf16.msra.mxu0 0
    %149 = vmatprep.subr.bf16.mxu0 0
    %150 = vmatpush1.bf16.msra.mxu0 0
    %151 = vmatprep.subr.bf16.mxu0 0
    %152 = vmatpush1.bf16.msra.mxu0 0
    %153 = vmatprep.subr.bf16.mxu0 0
    %154 = vmatpush1.bf16.msra.mxu0 0
    %155 = vmatprep.mubr.bf16.mxu0 0
    %156 = vmatmul.mubr.bf16.gmra.mrb[0].mxu0 %v85
    %v157 = vpop.f32.mrb[0].mxu0
    %v158 = vadd.f32 %v75, %v157
    %v159 = vpop.f32.mrb[0].mxu0
    %v160 = vpop.f32.mrb[0].mxu0
    %v161 = vadd.f32 %v75, %v160
    %v162 = vpop.f32.mrb[0].mxu0
    %163 = vmatprep.mubr.bf16.mxu0 0
    %164 = vmatmul.mubr.bf16.gmra.mrb[0].mxu0 %v88
    %v165 = vpop.f32.mrb[0].mxu0
    %v166 = vadd.f32 %v75, %v165
    %v167 = vpop.f32.mrb[0].mxu0
    %v168 = vpop.f32.mrb[0].mxu0
    %v169 = vadd.f32 %v75, %v168
    %v170 = vpop.f32.mrb[0].mxu0
    %171 = vmatprep.mubr.bf16.mxu0 0
    %172 = vmatmul.mubr.bf16.gmra.mrb[0].mxu0 %v91
    %v173 = vpop.f32.mrb[0].mxu0
    %v174 = vadd.f32 %v75, %v173
    %v175 = vpop.f32.mrb[0].mxu0
    %v176 = vpop.f32.mrb[0].mxu0
    %v177 = vadd.f32 %v75, %v176
    %v178 = vpop.f32.mrb[0].mxu0
    %179 = vmatprep.mubr.bf16.mxu0 0
    %180 = vmatmul.mubr.bf16.gmra.mrb[0].mxu0 %v94
    %v181 = vpop.f32.mrb[0].mxu0
    %v182 = vadd.f32 %v75, %v181
    %v183 = vpop.f32.mrb[0].mxu0
    %v184 = vpop.f32.mrb[0].mxu0
    %v185 = vadd.f32 %v75, %v184
    %v186 = vpop.f32.mrb[0].mxu0
    %187 = vmatprep.mubr.bf16.mxu0 0
    %188 = vmatmul.mubr.bf16.gmra.mrb[0].mxu0 %v97
    %v189 = vpop.f32.mrb[0].mxu0
    %v190 = vadd.f32 %v75, %v189
    %v191 = vpop.f32.mrb[0].mxu0
    %v192 = vpop.f32.mrb[0].mxu0
    %v193 = vadd.f32 %v75, %v192
    %v194 = vpop.f32.mrb[0].mxu0
    %195 = vmatprep.mubr.bf16.mxu0 0
    %196 = vmatmul.mubr.bf16.gmra.mrb[0].mxu0 %v100
    %v197 = vpop.f32.mrb[0].mxu0
    %v198 = vadd.f32 %v75, %v197
    %v199 = vpop.f32.mrb[0].mxu0
    %v200 = vpop.f32.mrb[0].mxu0
    %v201 = vadd.f32 %v75, %v200
    %v202 = vpop.f32.mrb[0].mxu0
    %203 = vmatprep.mubr.bf16.mxu0 0
    %204 = vmatmul.mubr.bf16.gmra.mrb[0].mxu0 %v103
    %v205 = vpop.f32.mrb[0].mxu0
    %v206 = vadd.f32 %v75, %v205
    %v207 = vpop.f32.mrb[0].mxu0
    %v208 = vpop.f32.mrb[0].mxu0
    %v209 = vadd.f32 %v75, %v208
    %v210 = vpop.f32.mrb[0].mxu0
    %211 = vmatprep.mubr.bf16.mxu0 0
    %212 = vmatmul.mubr.bf16.gmra.mrb[0].mxu0 %v106
    %v213 = vpop.f32.mrb[0].mxu0
    %v214 = vadd.f32 %v75, %v213
    %v215 = vpop.f32.mrb[0].mxu0
    %v216 = vpop.f32.mrb[0].mxu0
    %v217 = vadd.f32 %v75, %v216
    %v218 = vpop.f32.mrb[0].mxu0
    %219 = vmatprep.mubr.bf16.mxu0 0
    %220 = vmatmul.mubr.bf16.gmra.mrb[0].mxu0 %v109
    %v221 = vpop.f32.mrb[0].mxu0
    %v222 = vadd.f32 %v75, %v221
    %v223 = vpop.f32.mrb[0].mxu0
    %v224 = vpop.f32.mrb[0].mxu0
    %v225 = vadd.f32 %v75, %v224
    %v226 = vpop.f32.mrb[0].mxu0
    %227 = vmatprep.mubr.bf16.mxu0 0
    %228 = vmatmul.mubr.bf16.gmra.mrb[0].mxu0 %v112
    %v229 = vpop.f32.mrb[0].mxu0
    %v230 = vadd.f32 %v75, %v229
    %v231 = vpop.f32.mrb[0].mxu0
    %v232 = vpop.f32.mrb[0].mxu0
    %v233 = vadd.f32 %v75, %v232
    %v234 = vpop.f32.mrb[0].mxu0
    %235 = vmatprep.mubr.bf16.mxu0 0
    %236 = vmatmul.mubr.bf16.gmra.mrb[0].mxu0 %v115
    %v237 = vpop.f32.mrb[0].mxu0
    %v238 = vadd.f32 %v75, %v237
    %v239 = vpop.f32.mrb[0].mxu0
    %v240 = vpop.f32.mrb[0].mxu0
    %v241 = vadd.f32 %v75, %v240
    %v242 = vpop.f32.mrb[0].mxu0
    %243 = vmatprep.mubr.bf16.mxu0 0
    %244 = vmatmul.mubr.bf16.gmra.mrb[0].mxu0 %v118
    %v245 = vpop.f32.mrb[0].mxu0
    %v246 = vadd.f32 %v75, %v245
    %v247 = vpop.f32.mrb[0].mxu0
    %v248 = vpop.f32.mrb[0].mxu0
    %v249 = vadd.f32 %v75, %v248
    %v250 = vpop.f32.mrb[0].mxu0
    %251 = vmatprep.mubr.bf16.mxu0 0
    %252 = vmatmul.mubr.bf16.gmra.mrb[0].mxu0 %v121
    %v253 = vpop.f32.mrb[0].mxu0
    %v254 = vadd.f32 %v75, %v253
    %v255 = vpop.f32.mrb[0].mxu0
    %v256 = vpop.f32.mrb[0].mxu0
    %v257 = vpop.f32.mrb[0].mxu0
    %258 = vdwg.mxu0
    %v259 = vmax.f32 %v158, 0.0
    %v260 = vmax.f32 %v161, 0.0
    %v261 = vmax.f32 %v166, 0.0
    %v262 = vmax.f32 %v169, 0.0
    %v263 = vmax.f32 %v174, 0.0
    %v264 = vmax.f32 %v177, 0.0
    %v265 = vmax.f32 %v182, 0.0
    %v266 = vmax.f32 %v185, 0.0
    %v267 = vmax.f32 %v190, 0.0
    %v268 = vmax.f32 %v193, 0.0
    %v269 = vmax.f32 %v198, 0.0
    %v270 = vmax.f32 %v201, 0.0
    %v271 = vmax.f32 %v206, 0.0
    %v272 = vmax.f32 %v209, 0.0
    %v273 = vmax.f32 %v214, 0.0
    %v274 = vmax.f32 %v217, 0.0
    %v275 = vmax.f32 %v222, 0.0
    %v276 = vmax.f32 %v225, 0.0
    %v277 = vmax.f32 %v230, 0.0
    %v278 = vmax.f32 %v233, 0.0
    %v279 = vmax.f32 %v238, 0.0
    %v280 = vmax.f32 %v241, 0.0
    %v281 = vmax.f32 %v246, 0.0
    %v282 = vmax.f32 %v249, 0.0
    %v283 = vmax.f32 %v254, 0.0
    %v284 = vpack.c.bf16 %v260, %v259
    %v285 = vpack.c.bf16 %v262, %v261
    %v286 = vpack.c.bf16 %v264, %v263
    %v287 = vpack.c.bf16 %v266, %v265
    %v288 = vpack.c.bf16 %v268, %v267
    %v289 = vpack.c.bf16 %v270, %v269
    %v290 = vpack.c.bf16 %v272, %v271
    %v291 = vpack.c.bf16 %v274, %v273
    %v292 = vpack.c.bf16 %v276, %v275
    %v293 = vpack.c.bf16 %v278, %v277
    %v294 = vpack.c.bf16 %v280, %v279
    %v295 = vpack.c.bf16 %v282, %v281
    %v296 = vpack.c.bf16 %v283, %v283
    %v297 = vld [vmem:[#allocation2 + $0x10] sm:$0xff]
    %v298 = vld [vmem:[#allocation2 + $0x18] sm:$0xff]
    %v299 = vld [vmem:[#allocation2 + $0x20] sm:$0xff]
    %v300 = vld [vmem:[#allocation2 + $0x28] sm:$0xff]
    %v301 = vld [vmem:[#allocation2 + $0x30] sm:$0xff]
    %v302 = vld [vmem:[#allocation2 + $0x38] sm:$0xff]
    %v303 = vld [vmem:[#allocation2 + $0x40] sm:$0xff]
    %v304 = vld [vmem:[#allocation2 + $0x48] sm:$0xff]
    %v305 = vld [vmem:[#allocation2 + $0x50] sm:$0xff]
    %v306 = vld [vmem:[#allocation2 + $0x58] sm:$0xff]
    %v307 = vld [vmem:[#allocation2 + $0x60] sm:$0xff]
    %v308 = vld [vmem:[#allocation2 + $0x68] sm:$0xff]
    %v309 = vld [vmem:[#allocation2 + $0x70] sm:$0xff]
    %v310 = vld [vmem:[#allocation2 + $0x78] sm:$0xff]
    %v311 = vld [vmem:[#allocation2 + $0x80] sm:$0xff]
    %v312 = vld [vmem:[#allocation2 + $0x88] sm:$0xff]
    %v313 = vld [vmem:[%s2 + $0x1] sm:$0x3]
    %v315 = vlaneseq
    %v316 = vshrl.u32 %v315, 7
    %v317 = vsub.s32 0, %v316
    %v318 = vrot.slane %v313, %v317
    %v319 = vlaneseq
    %v320 = vshrl.u32 %v319, 7
    %v321 = vsub.s32 1, %v320
    %v322 = vrot.slane %v313, %v321
    %v341 = vunpack.c.l.b16 %v297
    %v342 = vunpack.c.h.b16 %v297
    %v343 = vunpack.c.l.b16 %v298
    %v344 = vunpack.c.h.b16 %v298
    %v345 = vunpack.c.l.b16 %v299
    %v346 = vunpack.c.h.b16 %v299
    %v347 = vunpack.c.l.b16 %v300
    %v348 = vunpack.c.h.b16 %v300
    %v349 = vunpack.c.l.b16 %v301
    %v350 = vunpack.c.h.b16 %v301
    %v351 = vunpack.c.l.b16 %v302
    %v352 = vunpack.c.h.b16 %v302
    %v353 = vunpack.c.l.b16 %v303
    %v354 = vunpack.c.h.b16 %v303
    %v355 = vunpack.c.l.b16 %v304
    %v356 = vunpack.c.h.b16 %v304
    %v357 = vunpack.c.l.b16 %v305
    %v358 = vunpack.c.h.b16 %v305
    %v359 = vunpack.c.l.b16 %v306
    %v360 = vunpack.c.h.b16 %v306
    %v361 = vunpack.c.l.b16 %v307
    %v362 = vunpack.c.h.b16 %v307
    %v363 = vunpack.c.l.b16 %v308
    %v364 = vunpack.c.h.b16 %v308
    %v365 = vunpack.c.l.b16 %v309
    %v366 = vunpack.c.h.b16 %v309
    %v367 = vunpack.c.l.b16 %v310
    %v368 = vunpack.c.h.b16 %v310
    %v369 = vunpack.c.l.b16 %v311
    %v370 = vunpack.c.h.b16 %v311
    %v371 = vunpack.c.l.b16 %v312
    %v372 = vunpack.c.h.b16 %v312
    %v373 = vpack.c.b16 %v343, %v341
    %v374 = vpack.c.b16 %v344, %v342
    %v375 = vpack.c.b16 %v347, %v345
    %v376 = vpack.c.b16 %v348, %v346
    %v377 = vpack.c.b16 %v351, %v349
    %v378 = vpack.c.b16 %v352, %v350
    %v379 = vpack.c.b16 %v355, %v353
    %v380 = vpack.c.b16 %v356, %v354
    %v381 = vpack.c.b16 %v359, %v357
    %v382 = vpack.c.b16 %v360, %v358
    %v383 = vpack.c.b16 %v363, %v361
    %v384 = vpack.c.b16 %v364, %v362
    %v385 = vpack.c.b16 %v367, %v365
    %v386 = vpack.c.b16 %v368, %v366
    %v387 = vpack.c.b16 %v371, %v369
    %v388 = vpack.c.b16 %v372, %v370
    %405 = vmatprep.subr.bf16.mxu0 %v374
    %406 = vmatpush1.bf16.msra.mxu0 %v373
    %407 = vmatprep.subr.bf16.mxu0 %v376
    %408 = vmatpush1.bf16.msra.mxu0 %v375
    %409 = vmatprep.subr.bf16.mxu0 %v378
    %410 = vmatpush1.bf16.msra.mxu0 %v377
    %411 = vmatprep.subr.bf16.mxu0 %v380
    %412 = vmatpush1.bf16.msra.mxu0 %v379
    %413 = vmatprep.subr.bf16.mxu0 %v382
    %414 = vmatpush1.bf16.msra.mxu0 %v381
    %415 = vmatprep.subr.bf16.mxu0 %v384
    %416 = vmatpush1.bf16.msra.mxu0 %v383
    %417 = vmatprep.subr.bf16.mxu0 %v386
    %418 = vmatpush1.bf16.msra.mxu0 %v385
    %419 = vmatprep.subr.bf16.mxu0 %v388
    %420 = vmatpush1.bf16.msra.mxu0 %v387
    %421 = vmatprep.subr.bf16.mxu0 0
    %422 = vmatpush1.bf16.msra.mxu0 0
    %423 = vmatprep.subr.bf16.mxu0 0
    %424 = vmatpush1.bf16.msra.mxu0 0
    %425 = vmatprep.subr.bf16.mxu0 0
    %426 = vmatpush1.bf16.msra.mxu0 0
    %427 = vmatprep.subr.bf16.mxu0 0
    %428 = vmatpush1.bf16.msra.mxu0 0
    %429 = vmatprep.subr.bf16.mxu0 0
    %430 = vmatpush1.bf16.msra.mxu0 0
    %431 = vmatprep.subr.bf16.mxu0 0
    %432 = vmatpush1.bf16.msra.mxu0 0
    %433 = vmatprep.subr.bf16.mxu0 0
    %434 = vmatpush1.bf16.msra.mxu0 0
    %435 = vmatprep.subr.bf16.mxu0 0
    %436 = vmatpush1.bf16.msra.mxu0 0
    %437 = vmatprep.mubr.bf16.mxu0 0
    %438 = vmatmul.mubr.bf16.gmra.mrb[0].mxu0 %v284
    %v439 = vpop.f32.mrb[0].mxu0
    %v440 = vadd.f32 %v318, %v439
    %v441 = vpop.f32.mrb[0].mxu0
    %v442 = vadd.f32 %v322, %v441
    %v443 = vpop.f32.mrb[0].mxu0
    %v444 = vadd.f32 %v318, %v443
    %v445 = vpop.f32.mrb[0].mxu0
    %v446 = vadd.f32 %v322, %v445
    %447 = vmatprep.mubr.bf16.mxu0 0
    %448 = vmatmul.mubr.bf16.gmra.mrb[0].mxu0 %v285
    %v449 = vpop.f32.mrb[0].mxu0
    %v450 = vadd.f32 %v318, %v449
    %v451 = vpop.f32.mrb[0].mxu0
    %v452 = vadd.f32 %v322, %v451
    %v453 = vpop.f32.mrb[0].mxu0
    %v454 = vadd.f32 %v318, %v453
    %v455 = vpop.f32.mrb[0].mxu0
    %v456 = vadd.f32 %v322, %v455
    %457 = vmatprep.mubr.bf16.mxu0 0
    %458 = vmatmul.mubr.bf16.gmra.mrb[0].mxu0 %v286
    %v459 = vpop.f32.mrb[0].mxu0
    %v460 = vadd.f32 %v318, %v459
    %v461 = vpop.f32.mrb[0].mxu0
    %v462 = vadd.f32 %v322, %v461
    %v463 = vpop.f32.mrb[0].mxu0
    %v464 = vadd.f32 %v318, %v463
    %v465 = vpop.f32.mrb[0].mxu0
    %v466 = vadd.f32 %v322, %v465
    %467 = vmatprep.mubr.bf16.mxu0 0
    %468 = vmatmul.mubr.bf16.gmra.mrb[0].mxu0 %v287
    %v469 = vpop.f32.mrb[0].mxu0
    %v470 = vadd.f32 %v318, %v469
    %v471 = vpop.f32.mrb[0].mxu0
    %v472 = vadd.f32 %v322, %v471
    %v473 = vpop.f32.mrb[0].mxu0
    %v474 = vadd.f32 %v318, %v473
    %v475 = vpop.f32.mrb[0].mxu0
    %v476 = vadd.f32 %v322, %v475
    %477 = vmatprep.mubr.bf16.mxu0 0
    %478 = vmatmul.mubr.bf16.gmra.mrb[0].mxu0 %v288
    %v479 = vpop.f32.mrb[0].mxu0
    %v480 = vadd.f32 %v318, %v479
    %v481 = vpop.f32.mrb[0].mxu0
    %v482 = vadd.f32 %v322, %v481
    %v483 = vpop.f32.mrb[0].mxu0
    %v484 = vadd.f32 %v318, %v483
    %v485 = vpop.f32.mrb[0].mxu0
    %v486 = vadd.f32 %v322, %v485
    %487 = vmatprep.mubr.bf16.mxu0 0
    %488 = vmatmul.mubr.bf16.gmra.mrb[0].mxu0 %v289
    %v489 = vpop.f32.mrb[0].mxu0
    %v490 = vadd.f32 %v318, %v489
    %v491 = vpop.f32.mrb[0].mxu0
    %v492 = vadd.f32 %v322, %v491
    %v493 = vpop.f32.mrb[0].mxu0
    %v494 = vadd.f32 %v318, %v493
    %v495 = vpop.f32.mrb[0].mxu0
    %v496 = vadd.f32 %v322, %v495
    %497 = vmatprep.mubr.bf16.mxu0 0
    %498 = vmatmul.mubr.bf16.gmra.mrb[0].mxu0 %v290
    %v499 = vpop.f32.mrb[0].mxu0
    %v500 = vadd.f32 %v318, %v499
    %v501 = vpop.f32.mrb[0].mxu0
    %v502 = vadd.f32 %v322, %v501
    %v503 = vpop.f32.mrb[0].mxu0
    %v504 = vadd.f32 %v318, %v503
    %v505 = vpop.f32.mrb[0].mxu0
    %v506 = vadd.f32 %v322, %v505
    %507 = vmatprep.mubr.bf16.mxu0 0
    %508 = vmatmul.mubr.bf16.gmra.mrb[0].mxu0 %v291
    %v509 = vpop.f32.mrb[0].mxu0
    %v510 = vadd.f32 %v318, %v509
    %v511 = vpop.f32.mrb[0].mxu0
    %v512 = vadd.f32 %v322, %v511
    %v513 = vpop.f32.mrb[0].mxu0
    %v514 = vadd.f32 %v318, %v513
    %v515 = vpop.f32.mrb[0].mxu0
    %v516 = vadd.f32 %v322, %v515
    %517 = vmatprep.mubr.bf16.mxu0 0
    %518 = vmatmul.mubr.bf16.gmra.mrb[0].mxu0 %v292
    %v519 = vpop.f32.mrb[0].mxu0
    %v520 = vadd.f32 %v318, %v519
    %v521 = vpop.f32.mrb[0].mxu0
    %v522 = vadd.f32 %v322, %v521
    %v523 = vpop.f32.mrb[0].mxu0
    %v524 = vadd.f32 %v318, %v523
    %v525 = vpop.f32.mrb[0].mxu0
    %v526 = vadd.f32 %v322, %v525
    %527 = vmatprep.mubr.bf16.mxu0 0
    %528 = vmatmul.mubr.bf16.gmra.mrb[0].mxu0 %v293
    %v529 = vpop.f32.mrb[0].mxu0
    %v530 = vadd.f32 %v318, %v529
    %v531 = vpop.f32.mrb[0].mxu0
    %v532 = vadd.f32 %v322, %v531
    %v533 = vpop.f32.mrb[0].mxu0
    %v534 = vadd.f32 %v318, %v533
    %v535 = vpop.f32.mrb[0].mxu0
    %v536 = vadd.f32 %v322, %v535
    %537 = vmatprep.mubr.bf16.mxu0 0
    %538 = vmatmul.mubr.bf16.gmra.mrb[0].mxu0 %v294
    %v539 = vpop.f32.mrb[0].mxu0
    %v540 = vadd.f32 %v318, %v539
    %v541 = vpop.f32.mrb[0].mxu0
    %v542 = vadd.f32 %v322, %v541
    %v543 = vpop.f32.mrb[0].mxu0
    %v544 = vadd.f32 %v318, %v543
    %v545 = vpop.f32.mrb[0].mxu0
    %v546 = vadd.f32 %v322, %v545
    %547 = vmatprep.mubr.bf16.mxu0 0
    %548 = vmatmul.mubr.bf16.gmra.mrb[0].mxu0 %v295
    %v549 = vpop.f32.mrb[0].mxu0
    %v550 = vadd.f32 %v318, %v549
    %v551 = vpop.f32.mrb[0].mxu0
    %v552 = vadd.f32 %v322, %v551
    %v553 = vpop.f32.mrb[0].mxu0
    %v554 = vadd.f32 %v318, %v553
    %v555 = vpop.f32.mrb[0].mxu0
    %v556 = vadd.f32 %v322, %v555
    %557 = vmatprep.mubr.bf16.mxu0 0
    %558 = vmatmul.mubr.bf16.gmra.mrb[0].mxu0 %v296
    %v559 = vpop.f32.mrb[0].mxu0
    %v560 = vadd.f32 %v318, %v559
    %v561 = vpop.f32.mrb[0].mxu0
    %v562 = vadd.f32 %v322, %v561
    %v563 = vpop.f32.mrb[0].mxu0
    %v564 = vpop.f32.mrb[0].mxu0
    %565 = vdwg.mxu0
    %v566 = vmax.f32 %v440, 0.0
    %v567 = vmax.f32 %v442, 0.0
    %v568 = vmax.f32 %v444, 0.0
    %v569 = vmax.f32 %v446, 0.0
    %v570 = vmax.f32 %v450, 0.0
    %v571 = vmax.f32 %v452, 0.0
    %v572 = vmax.f32 %v454, 0.0
    %v573 = vmax.f32 %v456, 0.0
    %v574 = vmax.f32 %v460, 0.0
    %v575 = vmax.f32 %v462, 0.0
    %v576 = vmax.f32 %v464, 0.0
    %v577 = vmax.f32 %v466, 0.0
    %v578 = vmax.f32 %v470, 0.0
    %v579 = vmax.f32 %v472, 0.0
    %v580 = vmax.f32 %v474, 0.0
    %v581 = vmax.f32 %v476, 0.0
    %v582 = vmax.f32 %v480, 0.0
    %v583 = vmax.f32 %v482, 0.0
    %v584 = vmax.f32 %v484, 0.0
    %v585 = vmax.f32 %v486, 0.0
    %v586 = vmax.f32 %v490, 0.0
    %v587 = vmax.f32 %v492, 0.0
    %v588 = vmax.f32 %v494, 0.0
    %v589 = vmax.f32 %v496, 0.0
    %v590 = vmax.f32 %v500, 0.0
    %v591 = vmax.f32 %v502, 0.0
    %v592 = vmax.f32 %v504, 0.0
    %v593 = vmax.f32 %v506, 0.0
    %v594 = vmax.f32 %v510, 0.0
    %v595 = vmax.f32 %v512, 0.0
    %v596 = vmax.f32 %v514, 0.0
    %v597 = vmax.f32 %v516, 0.0
    %v598 = vmax.f32 %v520, 0.0
    %v599 = vmax.f32 %v522, 0.0
    %v600 = vmax.f32 %v524, 0.0
    %v601 = vmax.f32 %v526, 0.0
    %v602 = vmax.f32 %v530, 0.0
    %v603 = vmax.f32 %v532, 0.0
    %v604 = vmax.f32 %v534, 0.0
    %v605 = vmax.f32 %v536, 0.0
    %v606 = vmax.f32 %v540, 0.0
    %v607 = vmax.f32 %v542, 0.0
    %v608 = vmax.f32 %v544, 0.0
    %v609 = vmax.f32 %v546, 0.0
    %v610 = vmax.f32 %v550, 0.0
    %v611 = vmax.f32 %v552, 0.0
    %v612 = vmax.f32 %v554, 0.0
    %v613 = vmax.f32 %v556, 0.0
    %v614 = vmax.f32 %v560, 0.0
    %v615 = vmax.f32 %v562, 0.0
    %v616 = vpack.c.bf16 %v568, %v566
    %v617 = vpack.c.bf16 %v569, %v567
    %v618 = vpack.c.bf16 %v572, %v570
    %v619 = vpack.c.bf16 %v573, %v571
    %v620 = vpack.c.bf16 %v576, %v574
    %v621 = vpack.c.bf16 %v577, %v575
    %v622 = vpack.c.bf16 %v580, %v578
    %v623 = vpack.c.bf16 %v581, %v579
    %v624 = vpack.c.bf16 %v584, %v582
    %v625 = vpack.c.bf16 %v585, %v583
    %v626 = vpack.c.bf16 %v588, %v586
    %v627 = vpack.c.bf16 %v589, %v587
    %v628 = vpack.c.bf16 %v592, %v590
    %v629 = vpack.c.bf16 %v593, %v591
    %v630 = vpack.c.bf16 %v596, %v594
    %v631 = vpack.c.bf16 %v597, %v595
    %v632 = vpack.c.bf16 %v600, %v598
    %v633 = vpack.c.bf16 %v601, %v599
    %v634 = vpack.c.bf16 %v604, %v602
    %v635 = vpack.c.bf16 %v605, %v603
    %v636 = vpack.c.bf16 %v608, %v606
    %v637 = vpack.c.bf16 %v609, %v607
    %v638 = vpack.c.bf16 %v612, %v610
    %v639 = vpack.c.bf16 %v613, %v611
    %v640 = vpack.c.bf16 %v614, %v614
    %v641 = vpack.c.bf16 %v615, %v615
    %v642 = vld [vmem:[#allocation2 + $0x90] sm:$0xff]
    %v643 = vld [vmem:[#allocation2 + $0x98] sm:$0xff]
    %v644 = vld [vmem:[#allocation2 + $0xa0] sm:$0xff]
    %v645 = vld [vmem:[#allocation2 + $0xa8] sm:$0xff]
    %v646 = vld [vmem:[#allocation2 + $0xb0] sm:$0xff]
    %v647 = vld [vmem:[#allocation2 + $0xb8] sm:$0xff]
    %v648 = vld [vmem:[#allocation2 + $0xc0] sm:$0xff]
    %v649 = vld [vmem:[#allocation2 + $0xc8] sm:$0xff]
    %v650 = vld [vmem:[#allocation2 + $0xd0] sm:$0xff]
    %v651 = vld [vmem:[#allocation2 + $0xd8] sm:$0xff]
    %v652 = vld [vmem:[#allocation2 + $0xe0] sm:$0xff]
    %v653 = vld [vmem:[#allocation2 + $0xe8] sm:$0xff]
    %v654 = vld [vmem:[#allocation2 + $0xf0] sm:$0xff]
    %v655 = vld [vmem:[#allocation2 + $0xf8] sm:$0xff]
    %v656 = vld [vmem:[#allocation2 + $0x100] sm:$0xff]
    %v657 = vld [vmem:[#allocation2 + $0x108] sm:$0xff]
    %v658 = vld [vmem:[#allocation2 + $0x110] sm:$0xff]
    %v659 = vld [vmem:[#allocation2 + $0x118] sm:$0xff]
    %v660 = vld [vmem:[#allocation2 + $0x120] sm:$0xff]
    %v661 = vld [vmem:[#allocation2 + $0x128] sm:$0xff]
    %v662 = vld [vmem:[#allocation2 + $0x130] sm:$0xff]
    %v663 = vld [vmem:[#allocation2 + $0x138] sm:$0xff]
    %v664 = vld [vmem:[#allocation2 + $0x140] sm:$0xff]
    %v665 = vld [vmem:[#allocation2 + $0x148] sm:$0xff]
    %v666 = vld [vmem:[#allocation2 + $0x150] sm:$0xff]
    %v667 = vld [vmem:[#allocation2 + $0x158] sm:$0xff]
    %v668 = vld [vmem:[#allocation2 + $0x160] sm:$0xff]
    %v669 = vld [vmem:[#allocation2 + $0x168] sm:$0xff]
    %v670 = vld [vmem:[#allocation2 + $0x170] sm:$0xff]
    %v671 = vld [vmem:[#allocation2 + $0x178] sm:$0xff]
    %v672 = vld [vmem:[#allocation2 + $0x180] sm:$0xff]
    %v673 = vld [vmem:[#allocation2 + $0x188] sm:$0xff]
    %v674 = vld [vmem:[%s2 + $0x3] sm:$0x3]
    %v676 = vlaneseq
    %v677 = vshrl.u32 %v676, 7
    %v678 = vsub.s32 0, %v677
    %v679 = vrot.slane %v674, %v678
    %v680 = vlaneseq
    %v681 = vshrl.u32 %v680, 7
    %v682 = vsub.s32 1, %v681
    %v683 = vrot.slane %v674, %v682
    %v718 = vunpack.c.l.b16 %v642
    %v719 = vunpack.c.h.b16 %v642
    %v720 = vunpack.c.l.b16 %v643
    %v721 = vunpack.c.h.b16 %v643
    %v722 = vunpack.c.l.b16 %v644
    %v723 = vunpack.c.h.b16 %v644
    %v724 = vunpack.c.l.b16 %v645
    %v725 = vunpack.c.h.b16 %v645
    %v726 = vunpack.c.l.b16 %v646
    %v727 = vunpack.c.h.b16 %v646
    %v728 = vunpack.c.l.b16 %v647
    %v729 = vunpack.c.h.b16 %v647
    %v730 = vunpack.c.l.b16 %v648
    %v731 = vunpack.c.h.b16 %v648
    %v732 = vunpack.c.l.b16 %v649
    %v733 = vunpack.c.h.b16 %v649
    %v734 = vunpack.c.l.b16 %v650
    %v735 = vunpack.c.h.b16 %v650
    %v736 = vunpack.c.l.b16 %v651
    %v737 = vunpack.c.h.b16 %v651
    %v738 = vunpack.c.l.b16 %v652
    %v739 = vunpack.c.h.b16 %v652
    %v740 = vunpack.c.l.b16 %v653
    %v741 = vunpack.c.h.b16 %v653
    %v742 = vunpack.c.l.b16 %v654
    %v743 = vunpack.c.h.b16 %v654
    %v744 = vunpack.c.l.b16 %v655
    %v745 = vunpack.c.h.b16 %v655
    %v746 = vunpack.c.l.b16 %v656
    %v747 = vunpack.c.h.b16 %v656
    %v748 = vunpack.c.l.b16 %v657
    %v749 = vunpack.c.h.b16 %v657
    %v750 = vunpack.c.l.b16 %v658
    %v751 = vunpack.c.h.b16 %v658
    %v752 = vunpack.c.l.b16 %v659
    %v753 = vunpack.c.h.b16 %v659
    %v754 = vunpack.c.l.b16 %v660
    %v755 = vunpack.c.h.b16 %v660
    %v756 = vunpack.c.l.b16 %v661
    %v757 = vunpack.c.h.b16 %v661
    %v758 = vunpack.c.l.b16 %v662
    %v759 = vunpack.c.h.b16 %v662
    %v760 = vunpack.c.l.b16 %v663
    %v761 = vunpack.c.h.b16 %v663
    %v762 = vunpack.c.l.b16 %v664
    %v763 = vunpack.c.h.b16 %v664
    %v764 = vunpack.c.l.b16 %v665
    %v765 = vunpack.c.h.b16 %v665
    %v766 = vunpack.c.l.b16 %v666
    %v767 = vunpack.c.h.b16 %v666
    %v768 = vunpack.c.l.b16 %v667
    %v769 = vunpack.c.h.b16 %v667
    %v770 = vunpack.c.l.b16 %v668
    %v771 = vunpack.c.h.b16 %v668
    %v772 = vunpack.c.l.b16 %v669
    %v773 = vunpack.c.h.b16 %v669
    %v774 = vunpack.c.l.b16 %v670
    %v775 = vunpack.c.h.b16 %v670
    %v776 = vunpack.c.l.b16 %v671
    %v777 = vunpack.c.h.b16 %v671
    %v778 = vunpack.c.l.b16 %v672
    %v779 = vunpack.c.h.b16 %v672
    %v780 = vunpack.c.l.b16 %v673
    %v781 = vunpack.c.h.b16 %v673
    %v782 = vpack.c.b16 %v720, %v718
    %v783 = vpack.c.b16 %v721, %v719
    %v784 = vpack.c.b16 %v724, %v722
    %v785 = vpack.c.b16 %v725, %v723
    %v786 = vpack.c.b16 %v728, %v726
    %v787 = vpack.c.b16 %v729, %v727
    %v788 = vpack.c.b16 %v732, %v730
    %v789 = vpack.c.b16 %v733, %v731
    %v790 = vpack.c.b16 %v736, %v734
    %v791 = vpack.c.b16 %v737, %v735
    %v792 = vpack.c.b16 %v740, %v738
    %v793 = vpack.c.b16 %v741, %v739
    %v794 = vpack.c.b16 %v744, %v742
    %v795 = vpack.c.b16 %v745, %v743
    %v796 = vpack.c.b16 %v748, %v746
    %v797 = vpack.c.b16 %v749, %v747
    %v798 = vpack.c.b16 %v752, %v750
    %v799 = vpack.c.b16 %v753, %v751
    %v800 = vpack.c.b16 %v756, %v754
    %v801 = vpack.c.b16 %v757, %v755
    %v802 = vpack.c.b16 %v760, %v758
    %v803 = vpack.c.b16 %v761, %v759
    %v804 = vpack.c.b16 %v764, %v762
    %v805 = vpack.c.b16 %v765, %v763
    %v806 = vpack.c.b16 %v768, %v766
    %v807 = vpack.c.b16 %v769, %v767
    %v808 = vpack.c.b16 %v772, %v770
    %v809 = vpack.c.b16 %v773, %v771
    %v810 = vpack.c.b16 %v776, %v774
    %v811 = vpack.c.b16 %v777, %v775
    %v812 = vpack.c.b16 %v780, %v778
    %v813 = vpack.c.b16 %v781, %v779
    %846 = vmatprep.subr.bf16.mxu0 %v783
    %847 = vmatpush1.bf16.msra.mxu0 %v782
    %848 = vmatprep.subr.bf16.mxu0 %v785
    %849 = vmatpush1.bf16.msra.mxu0 %v784
    %850 = vmatprep.subr.bf16.mxu0 %v787
    %851 = vmatpush1.bf16.msra.mxu0 %v786
    %852 = vmatprep.subr.bf16.mxu0 %v789
    %853 = vmatpush1.bf16.msra.mxu0 %v788
    %854 = vmatprep.subr.bf16.mxu0 %v791
    %855 = vmatpush1.bf16.msra.mxu0 %v790
    %856 = vmatprep.subr.bf16.mxu0 %v793
    %857 = vmatpush1.bf16.msra.mxu0 %v792
    %858 = vmatprep.subr.bf16.mxu0 %v795
    %859 = vmatpush1.bf16.msra.mxu0 %v794
    %860 = vmatprep.subr.bf16.mxu0 %v797
    %861 = vmatpush1.bf16.msra.mxu0 %v796
    %862 = vmatprep.subr.bf16.mxu0 %v799
    %863 = vmatpush1.bf16.msra.mxu0 %v798
    %864 = vmatprep.subr.bf16.mxu0 %v801
    %865 = vmatpush1.bf16.msra.mxu0 %v800
    %866 = vmatprep.subr.bf16.mxu0 %v803
    %867 = vmatpush1.bf16.msra.mxu0 %v802
    %868 = vmatprep.subr.bf16.mxu0 %v805
    %869 = vmatpush1.bf16.msra.mxu0 %v804
    %870 = vmatprep.subr.bf16.mxu0 %v807
    %871 = vmatpush1.bf16.msra.mxu0 %v806
    %872 = vmatprep.subr.bf16.mxu0 %v809
    %873 = vmatpush1.bf16.msra.mxu0 %v808
    %874 = vmatprep.subr.bf16.mxu0 %v811
    %875 = vmatpush1.bf16.msra.mxu0 %v810
    %876 = vmatprep.subr.bf16.mxu0 %v813
    %877 = vmatpush1.bf16.msra.mxu0 %v812
    %878 = vmatprep.mubr.bf16.mxu0 %v617
    %879 = vmatmul.mubr.bf16.gmra.mrb[0].mxu0 %v616
    %v880 = vpop.f32.mrb[0].mxu0
    %v881 = vadd.f32 %v679, %v880
    %v882 = vpop.f32.mrb[0].mxu0
    %v883 = vadd.f32 %v683, %v882
    %v884 = vpop.f32.mrb[0].mxu0
    %v885 = vadd.f32 %v679, %v884
    %v886 = vpop.f32.mrb[0].mxu0
    %v887 = vadd.f32 %v683, %v886
    %888 = vmatprep.mubr.bf16.mxu0 %v619
    %889 = vmatmul.mubr.bf16.gmra.mrb[0].mxu0 %v618
    %v890 = vpop.f32.mrb[0].mxu0
    %v891 = vadd.f32 %v679, %v890
    %v892 = vpop.f32.mrb[0].mxu0
    %v893 = vadd.f32 %v683, %v892
    %v894 = vpop.f32.mrb[0].mxu0
    %v895 = vadd.f32 %v679, %v894
    %v896 = vpop.f32.mrb[0].mxu0
    %v897 = vadd.f32 %v683, %v896
    %898 = vmatprep.mubr.bf16.mxu0 %v621
    %899 = vmatmul.mubr.bf16.gmra.mrb[0].mxu0 %v620
    %v900 = vpop.f32.mrb[0].mxu0
    %v901 = vadd.f32 %v679, %v900
    %v902 = vpop.f32.mrb[0].mxu0
    %v903 = vadd.f32 %v683, %v902
    %v904 = vpop.f32.mrb[0].mxu0
    %v905 = vadd.f32 %v679, %v904
    %v906 = vpop.f32.mrb[0].mxu0
    %v907 = vadd.f32 %v683, %v906
    %908 = vmatprep.mubr.bf16.mxu0 %v623
    %909 = vmatmul.mubr.bf16.gmra.mrb[0].mxu0 %v622
    %v910 = vpop.f32.mrb[0].mxu0
    %v911 = vadd.f32 %v679, %v910
    %v912 = vpop.f32.mrb[0].mxu0
    %v913 = vadd.f32 %v683, %v912
    %v914 = vpop.f32.mrb[0].mxu0
    %v915 = vadd.f32 %v679, %v914
    %v916 = vpop.f32.mrb[0].mxu0
    %v917 = vadd.f32 %v683, %v916
    %918 = vmatprep.mubr.bf16.mxu0 %v625
    %919 = vmatmul.mubr.bf16.gmra.mrb[0].mxu0 %v624
    %v920 = vpop.f32.mrb[0].mxu0
    %v921 = vadd.f32 %v679, %v920
    %v922 = vpop.f32.mrb[0].mxu0
    %v923 = vadd.f32 %v683, %v922
    %v924 = vpop.f32.mrb[0].mxu0
    %v925 = vadd.f32 %v679, %v924
    %v926 = vpop.f32.mrb[0].mxu0
    %v927 = vadd.f32 %v683, %v926
    %928 = vmatprep.mubr.bf16.mxu0 %v627
    %929 = vmatmul.mubr.bf16.gmra.mrb[0].mxu0 %v626
    %v930 = vpop.f32.mrb[0].mxu0
    %v931 = vadd.f32 %v679, %v930
    %v932 = vpop.f32.mrb[0].mxu0
    %v933 = vadd.f32 %v683, %v932
    %v934 = vpop.f32.mrb[0].mxu0
    %v935 = vadd.f32 %v679, %v934
    %v936 = vpop.f32.mrb[0].mxu0
    %v937 = vadd.f32 %v683, %v936
    %938 = vmatprep.mubr.bf16.mxu0 %v629
    %939 = vmatmul.mubr.bf16.gmra.mrb[0].mxu0 %v628
    %v940 = vpop.f32.mrb[0].mxu0
    %v941 = vadd.f32 %v679, %v940
    %v942 = vpop.f32.mrb[0].mxu0
    %v943 = vadd.f32 %v683, %v942
    %v944 = vpop.f32.mrb[0].mxu0
    %v945 = vadd.f32 %v679, %v944
    %v946 = vpop.f32.mrb[0].mxu0
    %v947 = vadd.f32 %v683, %v946
    %948 = vmatprep.mubr.bf16.mxu0 %v631
    %949 = vmatmul.mubr.bf16.gmra.mrb[0].mxu0 %v630
    %v950 = vpop.f32.mrb[0].mxu0
    %v951 = vadd.f32 %v679, %v950
    %v952 = vpop.f32.mrb[0].mxu0
    %v953 = vadd.f32 %v683, %v952
    %v954 = vpop.f32.mrb[0].mxu0
    %v955 = vadd.f32 %v679, %v954
    %v956 = vpop.f32.mrb[0].mxu0
    %v957 = vadd.f32 %v683, %v956
    %958 = vmatprep.mubr.bf16.mxu0 %v633
    %959 = vmatmul.mubr.bf16.gmra.mrb[0].mxu0 %v632
    %v960 = vpop.f32.mrb[0].mxu0
    %v961 = vadd.f32 %v679, %v960
    %v962 = vpop.f32.mrb[0].mxu0
    %v963 = vadd.f32 %v683, %v962
    %v964 = vpop.f32.mrb[0].mxu0
    %v965 = vadd.f32 %v679, %v964
    %v966 = vpop.f32.mrb[0].mxu0
    %v967 = vadd.f32 %v683, %v966
    %968 = vmatprep.mubr.bf16.mxu0 %v635
    %969 = vmatmul.mubr.bf16.gmra.mrb[0].mxu0 %v634
    %v970 = vpop.f32.mrb[0].mxu0
    %v971 = vadd.f32 %v679, %v970
    %v972 = vpop.f32.mrb[0].mxu0
    %v973 = vadd.f32 %v683, %v972
    %v974 = vpop.f32.mrb[0].mxu0
    %v975 = vadd.f32 %v679, %v974
    %v976 = vpop.f32.mrb[0].mxu0
    %v977 = vadd.f32 %v683, %v976
    %978 = vmatprep.mubr.bf16.mxu0 %v637
    %979 = vmatmul.mubr.bf16.gmra.mrb[0].mxu0 %v636
    %v980 = vpop.f32.mrb[0].mxu0
    %v981 = vadd.f32 %v679, %v980
    %v982 = vpop.f32.mrb[0].mxu0
    %v983 = vadd.f32 %v683, %v982
    %v984 = vpop.f32.mrb[0].mxu0
    %v985 = vadd.f32 %v679, %v984
    %v986 = vpop.f32.mrb[0].mxu0
    %v987 = vadd.f32 %v683, %v986
    %988 = vmatprep.mubr.bf16.mxu0 %v639
    %989 = vmatmul.mubr.bf16.gmra.mrb[0].mxu0 %v638
    %v990 = vpop.f32.mrb[0].mxu0
    %v991 = vadd.f32 %v679, %v990
    %v992 = vpop.f32.mrb[0].mxu0
    %v993 = vadd.f32 %v683, %v992
    %v994 = vpop.f32.mrb[0].mxu0
    %v995 = vadd.f32 %v679, %v994
    %v996 = vpop.f32.mrb[0].mxu0
    %v997 = vadd.f32 %v683, %v996
    %998 = vmatprep.mubr.bf16.mxu0 %v641
    %999 = vmatmul.mubr.bf16.gmra.mrb[0].mxu0 %v640
    %v1000 = vpop.f32.mrb[0].mxu0
    %v1001 = vadd.f32 %v679, %v1000
    %v1002 = vpop.f32.mrb[0].mxu0
    %v1003 = vadd.f32 %v683, %v1002
    %v1004 = vpop.f32.mrb[0].mxu0
    %v1005 = vpop.f32.mrb[0].mxu0
    %1006 = vdwg.mxu0
    %v1007 = vmax.f32 %v881, 0.0
    %v1008 = vmax.f32 %v883, 0.0
    %v1009 = vmax.f32 %v885, 0.0
    %v1010 = vmax.f32 %v887, 0.0
    %v1011 = vmax.f32 %v891, 0.0
    %v1012 = vmax.f32 %v893, 0.0
    %v1013 = vmax.f32 %v895, 0.0
    %v1014 = vmax.f32 %v897, 0.0
    %v1015 = vmax.f32 %v901, 0.0
    %v1016 = vmax.f32 %v903, 0.0
    %v1017 = vmax.f32 %v905, 0.0
    %v1018 = vmax.f32 %v907, 0.0
    %v1019 = vmax.f32 %v911, 0.0
    %v1020 = vmax.f32 %v913, 0.0
    %v1021 = vmax.f32 %v915, 0.0
    %v1022 = vmax.f32 %v917, 0.0
    %v1023 = vmax.f32 %v921, 0.0
    %v1024 = vmax.f32 %v923, 0.0
    %v1025 = vmax.f32 %v925, 0.0
    %v1026 = vmax.f32 %v927, 0.0
    %v1027 = vmax.f32 %v931, 0.0
    %v1028 = vmax.f32 %v933, 0.0
    %v1029 = vmax.f32 %v935, 0.0
    %v1030 = vmax.f32 %v937, 0.0
    %v1031 = vmax.f32 %v941, 0.0
    %v1032 = vmax.f32 %v943, 0.0
    %v1033 = vmax.f32 %v945, 0.0
    %v1034 = vmax.f32 %v947, 0.0
    %v1035 = vmax.f32 %v951, 0.0
    %v1036 = vmax.f32 %v953, 0.0
    %v1037 = vmax.f32 %v955, 0.0
    %v1038 = vmax.f32 %v957, 0.0
    %v1039 = vmax.f32 %v961, 0.0
    %v1040 = vmax.f32 %v963, 0.0
    %v1041 = vmax.f32 %v965, 0.0
    %v1042 = vmax.f32 %v967, 0.0
    %v1043 = vmax.f32 %v971, 0.0
    %v1044 = vmax.f32 %v973, 0.0
    %v1045 = vmax.f32 %v975, 0.0
    %v1046 = vmax.f32 %v977, 0.0
    %v1047 = vmax.f32 %v981, 0.0
    %v1048 = vmax.f32 %v983, 0.0
    %v1049 = vmax.f32 %v985, 0.0
    %v1050 = vmax.f32 %v987, 0.0
    %v1051 = vmax.f32 %v991, 0.0
    %v1052 = vmax.f32 %v993, 0.0
    %v1053 = vmax.f32 %v995, 0.0
    %v1054 = vmax.f32 %v997, 0.0
    %v1055 = vmax.f32 %v1001, 0.0
    %v1056 = vmax.f32 %v1003, 0.0
    %v1057 = vpack.c.bf16 %v1009, %v1007
    %v1058 = vpack.c.bf16 %v1010, %v1008
    %v1059 = vpack.c.bf16 %v1013, %v1011
    %v1060 = vpack.c.bf16 %v1014, %v1012
    %v1061 = vpack.c.bf16 %v1017, %v1015
    %v1062 = vpack.c.bf16 %v1018, %v1016
    %v1063 = vpack.c.bf16 %v1021, %v1019
    %v1064 = vpack.c.bf16 %v1022, %v1020
    %v1065 = vpack.c.bf16 %v1025, %v1023
    %v1066 = vpack.c.bf16 %v1026, %v1024
    %v1067 = vpack.c.bf16 %v1029, %v1027
    %v1068 = vpack.c.bf16 %v1030, %v1028
    %v1069 = vpack.c.bf16 %v1033, %v1031
    %v1070 = vpack.c.bf16 %v1034, %v1032
    %v1071 = vpack.c.bf16 %v1037, %v1035
    %v1072 = vpack.c.bf16 %v1038, %v1036
    %v1073 = vpack.c.bf16 %v1041, %v1039
    %v1074 = vpack.c.bf16 %v1042, %v1040
    %v1075 = vpack.c.bf16 %v1045, %v1043
    %v1076 = vpack.c.bf16 %v1046, %v1044
    %v1077 = vpack.c.bf16 %v1049, %v1047
    %v1078 = vpack.c.bf16 %v1050, %v1048
    %v1079 = vpack.c.bf16 %v1053, %v1051
    %v1080 = vpack.c.bf16 %v1054, %v1052
    %v1081 = vpack.c.bf16 %v1055, %v1055
    %v1082 = vpack.c.bf16 %v1056, %v1056
    %v1083 = vld [vmem:[#allocation2 + $0x190] sm:$0xf]
    %v1084 = vld [vmem:[#allocation2 + $0x198] sm:$0xf]
    %v1085 = vld [vmem:[#allocation2 + $0x1a0] sm:$0xf]
    %v1086 = vld [vmem:[#allocation2 + $0x1a8] sm:$0xf]
    %v1087 = vld [vmem:[#allocation2 + $0x1b0] sm:$0xf]
    %v1088 = vld [vmem:[#allocation2 + $0x1b8] sm:$0xf]
    %v1089 = vld [vmem:[#allocation2 + $0x1c0] sm:$0xf]
    %v1090 = vld [vmem:[#allocation2 + $0x1c8] sm:$0xf]
    %v1091 = vld [vmem:[#allocation2 + $0x1d0] sm:$0xf]
    %v1092 = vld [vmem:[#allocation2 + $0x1d8] sm:$0xf]
    %v1093 = vld [vmem:[#allocation2 + $0x1e0] sm:$0xf]
    %v1094 = vld [vmem:[#allocation2 + $0x1e8] sm:$0xf]
    %v1095 = vld [vmem:[#allocation2 + $0x1f0] sm:$0xf]
    %v1096 = vld [vmem:[#allocation2 + $0x1f8] sm:$0xf]
    %v1097 = vld [vmem:[#allocation2 + $0x200] sm:$0xf]
    %v1098 = vld [vmem:[#allocation2 + $0x208] sm:$0xf]
    %v1099 = vld [vmem:[#allocation2 + $0x210] sm:$0xf]
    %v1100 = vld [vmem:[#allocation2 + $0x218] sm:$0xf]
    %v1101 = vld [vmem:[#allocation2 + $0x220] sm:$0xf]
    %v1102 = vld [vmem:[#allocation2 + $0x228] sm:$0xf]
    %v1103 = vld [vmem:[#allocation2 + $0x230] sm:$0xf]
    %v1104 = vld [vmem:[#allocation2 + $0x238] sm:$0xf]
    %v1105 = vld [vmem:[#allocation2 + $0x240] sm:$0xf]
    %v1106 = vld [vmem:[#allocation2 + $0x248] sm:$0xf]
    %v1107 = vld [vmem:[#allocation2 + $0x250] sm:$0xf]
    %v1108 = vld [vmem:[#allocation2 + $0x258] sm:$0xf]
    %v1109 = vld [vmem:[#allocation2 + $0x260] sm:$0xf]
    %v1110 = vld [vmem:[#allocation2 + $0x268] sm:$0xf]
    %v1111 = vld [vmem:[#allocation2 + $0x270] sm:$0xf]
    %v1112 = vld [vmem:[#allocation2 + $0x278] sm:$0xf]
    %v1113 = vld [vmem:[#allocation2 + $0x280] sm:$0xf]
    %v1114 = vld [vmem:[#allocation2 + $0x288] sm:$0xf]
    %v1115 = vld [vmem:[%s2 + $0x5] sm:$0x1]
    %v1117 = vlaneseq
    %v1118 = vshrl.u32 %v1117, 7
    %v1119 = vsub.s32 0, %v1118
    %v1120 = vrot.slane %v1115, %v1119
    %v1154 = vunpack.c.l.b16 %v1083
    %v1155 = vunpack.c.l.b16 %v1084
    %v1156 = vunpack.c.l.b16 %v1085
    %v1157 = vunpack.c.l.b16 %v1086
    %v1158 = vunpack.c.l.b16 %v1087
    %v1159 = vunpack.c.l.b16 %v1088
    %v1160 = vunpack.c.l.b16 %v1089
    %v1161 = vunpack.c.l.b16 %v1090
    %v1162 = vunpack.c.l.b16 %v1091
    %v1163 = vunpack.c.l.b16 %v1092
    %v1164 = vunpack.c.l.b16 %v1093
    %v1165 = vunpack.c.l.b16 %v1094
    %v1166 = vunpack.c.l.b16 %v1095
    %v1167 = vunpack.c.l.b16 %v1096
    %v1168 = vunpack.c.l.b16 %v1097
    %v1169 = vunpack.c.l.b16 %v1098
    %v1170 = vunpack.c.l.b16 %v1099
    %v1171 = vunpack.c.l.b16 %v1100
    %v1172 = vunpack.c.l.b16 %v1101
    %v1173 = vunpack.c.l.b16 %v1102
    %v1174 = vunpack.c.l.b16 %v1103
    %v1175 = vunpack.c.l.b16 %v1104
    %v1176 = vunpack.c.l.b16 %v1105
    %v1177 = vunpack.c.l.b16 %v1106
    %v1178 = vunpack.c.l.b16 %v1107
    %v1179 = vunpack.c.l.b16 %v1108
    %v1180 = vunpack.c.l.b16 %v1109
    %v1181 = vunpack.c.l.b16 %v1110
    %v1182 = vunpack.c.l.b16 %v1111
    %v1183 = vunpack.c.l.b16 %v1112
    %v1184 = vunpack.c.l.b16 %v1113
    %v1185 = vunpack.c.l.b16 %v1114
    %v1186 = vpack.c.b16 %v1155, %v1154
    %v1187 = vpack.c.b16 %v1157, %v1156
    %v1188 = vpack.c.b16 %v1159, %v1158
    %v1189 = vpack.c.b16 %v1161, %v1160
    %v1190 = vpack.c.b16 %v1163, %v1162
    %v1191 = vpack.c.b16 %v1165, %v1164
    %v1192 = vpack.c.b16 %v1167, %v1166
    %v1193 = vpack.c.b16 %v1169, %v1168
    %v1194 = vpack.c.b16 %v1171, %v1170
    %v1195 = vpack.c.b16 %v1173, %v1172
    %v1196 = vpack.c.b16 %v1175, %v1174
    %v1197 = vpack.c.b16 %v1177, %v1176
    %v1198 = vpack.c.b16 %v1179, %v1178
    %v1199 = vpack.c.b16 %v1181, %v1180
    %v1200 = vpack.c.b16 %v1183, %v1182
    %v1201 = vpack.c.b16 %v1185, %v1184
    %1218 = vmatprep.subr.bf16.mxu0 0
    %1219 = vmatpush1.bf16.msra.mxu0 %v1186
    %1220 = vmatprep.subr.bf16.mxu0 0
    %1221 = vmatpush1.bf16.msra.mxu0 %v1187
    %1222 = vmatprep.subr.bf16.mxu0 0
    %1223 = vmatpush1.bf16.msra.mxu0 %v1188
    %1224 = vmatprep.subr.bf16.mxu0 0
    %1225 = vmatpush1.bf16.msra.mxu0 %v1189
    %1226 = vmatprep.subr.bf16.mxu0 0
    %1227 = vmatpush1.bf16.msra.mxu0 %v1190
    %1228 = vmatprep.subr.bf16.mxu0 0
    %1229 = vmatpush1.bf16.msra.mxu0 %v1191
    %1230 = vmatprep.subr.bf16.mxu0 0
    %1231 = vmatpush1.bf16.msra.mxu0 %v1192
    %1232 = vmatprep.subr.bf16.mxu0 0
    %1233 = vmatpush1.bf16.msra.mxu0 %v1193
    %1234 = vmatprep.subr.bf16.mxu0 0
    %1235 = vmatpush1.bf16.msra.mxu0 %v1194
    %1236 = vmatprep.subr.bf16.mxu0 0
    %1237 = vmatpush1.bf16.msra.mxu0 %v1195
    %1238 = vmatprep.subr.bf16.mxu0 0
    %1239 = vmatpush1.bf16.msra.mxu0 %v1196
    %1240 = vmatprep.subr.bf16.mxu0 0
    %1241 = vmatpush1.bf16.msra.mxu0 %v1197
    %1242 = vmatprep.subr.bf16.mxu0 0
    %1243 = vmatpush1.bf16.msra.mxu0 %v1198
    %1244 = vmatprep.subr.bf16.mxu0 0
    %1245 = vmatpush1.bf16.msra.mxu0 %v1199
    %1246 = vmatprep.subr.bf16.mxu0 0
    %1247 = vmatpush1.bf16.msra.mxu0 %v1200
    %1248 = vmatprep.subr.bf16.mxu0 0
    %1249 = vmatpush1.bf16.msra.mxu0 %v1201
    %1250 = vmatprep.mubr.bf16.mxu0 %v1058
    %1251 = vmatmul.mubr.bf16.gmra.mrb[0].mxu0 %v1057
    %v1252 = vpop.f32.mrb[0].mxu0
    %v1253 = vadd.f32 %v1120, %v1252
    %v1254 = vpop.f32.mrb[0].mxu0
    %v1255 = vpop.f32.mrb[0].mxu0
    %v1256 = vadd.f32 %v1120, %v1255
    %v1257 = vpop.f32.mrb[0].mxu0
    %1258 = vmatprep.mubr.bf16.mxu0 %v1060
    %1259 = vmatmul.mubr.bf16.gmra.mrb[0].mxu0 %v1059
    %v1260 = vpop.f32.mrb[0].mxu0
    %v1261 = vadd.f32 %v1120, %v1260
    %v1262 = vpop.f32.mrb[0].mxu0
    %v1263 = vpop.f32.mrb[0].mxu0
    %v1264 = vadd.f32 %v1120, %v1263
    %v1265 = vpop.f32.mrb[0].mxu0
    %1266 = vmatprep.mubr.bf16.mxu0 %v1062
    %1267 = vmatmul.mubr.bf16.gmra.mrb[0].mxu0 %v1061
    %v1268 = vpop.f32.mrb[0].mxu0
    %v1269 = vadd.f32 %v1120, %v1268
    %v1270 = vpop.f32.mrb[0].mxu0
    %v1271 = vpop.f32.mrb[0].mxu0
    %v1272 = vadd.f32 %v1120, %v1271
    %v1273 = vpop.f32.mrb[0].mxu0
    %1274 = vmatprep.mubr.bf16.mxu0 %v1064
    %1275 = vmatmul.mubr.bf16.gmra.mrb[0].mxu0 %v1063
    %v1276 = vpop.f32.mrb[0].mxu0
    %v1277 = vadd.f32 %v1120, %v1276
    %v1278 = vpop.f32.mrb[0].mxu0
    %v1279 = vpop.f32.mrb[0].mxu0
    %v1280 = vadd.f32 %v1120, %v1279
    %v1281 = vpop.f32.mrb[0].mxu0
    %1282 = vmatprep.mubr.bf16.mxu0 %v1066
    %1283 = vmatmul.mubr.bf16.gmra.mrb[0].mxu0 %v1065
    %v1284 = vpop.f32.mrb[0].mxu0
    %v1285 = vadd.f32 %v1120, %v1284
    %v1286 = vpop.f32.mrb[0].mxu0
    %v1287 = vpop.f32.mrb[0].mxu0
    %v1288 = vadd.f32 %v1120, %v1287
    %v1289 = vpop.f32.mrb[0].mxu0
    %1290 = vmatprep.mubr.bf16.mxu0 %v1068
    %1291 = vmatmul.mubr.bf16.gmra.mrb[0].mxu0 %v1067
    %v1292 = vpop.f32.mrb[0].mxu0
    %v1293 = vadd.f32 %v1120, %v1292
    %v1294 = vpop.f32.mrb[0].mxu0
    %v1295 = vpop.f32.mrb[0].mxu0
    %v1296 = vadd.f32 %v1120, %v1295
    %v1297 = vpop.f32.mrb[0].mxu0
    %1298 = vmatprep.mubr.bf16.mxu0 %v1070
    %1299 = vmatmul.mubr.bf16.gmra.mrb[0].mxu0 %v1069
    %v1300 = vpop.f32.mrb[0].mxu0
    %v1301 = vadd.f32 %v1120, %v1300
    %v1302 = vpop.f32.mrb[0].mxu0
    %v1303 = vpop.f32.mrb[0].mxu0
    %v1304 = vadd.f32 %v1120, %v1303
    %v1305 = vpop.f32.mrb[0].mxu0
    %1306 = vmatprep.mubr.bf16.mxu0 %v1072
    %1307 = vmatmul.mubr.bf16.gmra.mrb[0].mxu0 %v1071
    %v1308 = vpop.f32.mrb[0].mxu0
    %v1309 = vadd.f32 %v1120, %v1308
    %v1310 = vpop.f32.mrb[0].mxu0
    %v1311 = vpop.f32.mrb[0].mxu0
    %v1312 = vadd.f32 %v1120, %v1311
    %v1313 = vpop.f32.mrb[0].mxu0
    %1314 = vmatprep.mubr.bf16.mxu0 %v1074
    %1315 = vmatmul.mubr.bf16.gmra.mrb[0].mxu0 %v1073
    %v1316 = vpop.f32.mrb[0].mxu0
    %v1317 = vadd.f32 %v1120, %v1316
    %v1318 = vpop.f32.mrb[0].mxu0
    %v1319 = vpop.f32.mrb[0].mxu0
    %v1320 = vadd.f32 %v1120, %v1319
    %v1321 = vpop.f32.mrb[0].mxu0
    %1322 = vmatprep.mubr.bf16.mxu0 %v1076
    %1323 = vmatmul.mubr.bf16.gmra.mrb[0].mxu0 %v1075
    %v1324 = vpop.f32.mrb[0].mxu0
    %v1325 = vadd.f32 %v1120, %v1324
    %v1326 = vpop.f32.mrb[0].mxu0
    %v1327 = vpop.f32.mrb[0].mxu0
    %v1328 = vadd.f32 %v1120, %v1327
    %v1329 = vpop.f32.mrb[0].mxu0
    %1330 = vmatprep.mubr.bf16.mxu0 %v1078
    %1331 = vmatmul.mubr.bf16.gmra.mrb[0].mxu0 %v1077
    %v1332 = vpop.f32.mrb[0].mxu0
    %v1333 = vadd.f32 %v1120, %v1332
    %v1334 = vpop.f32.mrb[0].mxu0
    %v1335 = vpop.f32.mrb[0].mxu0
    %v1336 = vadd.f32 %v1120, %v1335
    %v1337 = vpop.f32.mrb[0].mxu0
    %1338 = vmatprep.mubr.bf16.mxu0 %v1080
    %1339 = vmatmul.mubr.bf16.gmra.mrb[0].mxu0 %v1079
    %v1340 = vpop.f32.mrb[0].mxu0
    %v1341 = vadd.f32 %v1120, %v1340
    %v1342 = vpop.f32.mrb[0].mxu0
    %v1343 = vpop.f32.mrb[0].mxu0
    %v1344 = vadd.f32 %v1120, %v1343
    %v1345 = vpop.f32.mrb[0].mxu0
    %1346 = vmatprep.mubr.bf16.mxu0 %v1082
    %1347 = vmatmul.mubr.bf16.gmra.mrb[0].mxu0 %v1081
    %v1348 = vpop.f32.mrb[0].mxu0
    %v1349 = vadd.f32 %v1120, %v1348
    %v1350 = vpop.f32.mrb[0].mxu0
    %v1351 = vpop.f32.mrb[0].mxu0
    %v1352 = vpop.f32.mrb[0].mxu0
    %1353 = vdwg.mxu0
    %v1354 = vmax.f32 %v1253, 0.0
    %v1355 = vmax.f32 %v1256, 0.0
    %v1356 = vmax.f32 %v1261, 0.0
    %v1357 = vmax.f32 %v1264, 0.0
    %v1358 = vmax.f32 %v1269, 0.0
    %v1359 = vmax.f32 %v1272, 0.0
    %v1360 = vmax.f32 %v1277, 0.0
    %v1361 = vmax.f32 %v1280, 0.0
    %v1362 = vmax.f32 %v1285, 0.0
    %v1363 = vmax.f32 %v1288, 0.0
    %v1364 = vmax.f32 %v1293, 0.0
    %v1365 = vmax.f32 %v1296, 0.0
    %v1366 = vmax.f32 %v1301, 0.0
    %v1367 = vmax.f32 %v1304, 0.0
    %v1368 = vmax.f32 %v1309, 0.0
    %v1369 = vmax.f32 %v1312, 0.0
    %v1370 = vmax.f32 %v1317, 0.0
    %v1371 = vmax.f32 %v1320, 0.0
    %v1372 = vmax.f32 %v1325, 0.0
    %v1373 = vmax.f32 %v1328, 0.0
    %v1374 = vmax.f32 %v1333, 0.0
    %v1375 = vmax.f32 %v1336, 0.0
    %v1376 = vmax.f32 %v1341, 0.0
    %v1377 = vmax.f32 %v1344, 0.0
    %v1378 = vmax.f32 %v1349, 0.0
    %v1379 = vpack.c.bf16 %v1355, %v1354
    %v1380 = vpack.c.bf16 %v1357, %v1356
    %v1381 = vpack.c.bf16 %v1359, %v1358
    %v1382 = vpack.c.bf16 %v1361, %v1360
    %v1383 = vpack.c.bf16 %v1363, %v1362
    %v1384 = vpack.c.bf16 %v1365, %v1364
    %v1385 = vpack.c.bf16 %v1367, %v1366
    %v1386 = vpack.c.bf16 %v1369, %v1368
    %v1387 = vpack.c.bf16 %v1371, %v1370
    %v1388 = vpack.c.bf16 %v1373, %v1372
    %v1389 = vpack.c.bf16 %v1375, %v1374
    %v1390 = vpack.c.bf16 %v1377, %v1376
    %v1391 = vpack.c.bf16 %v1378, %v1378
    %v1392 = vld [vmem:[#allocation2 + $0x290] sm:$0xf]
    %v1393 = vld [vmem:[#allocation2 + $0x298] sm:$0xf]
    %v1394 = vld [vmem:[#allocation2 + $0x2a0] sm:$0xf]
    %v1395 = vld [vmem:[#allocation2 + $0x2a8] sm:$0xf]
    %v1396 = vld [vmem:[#allocation2 + $0x2b0] sm:$0xf]
    %v1397 = vld [vmem:[#allocation2 + $0x2b8] sm:$0xf]
    %v1398 = vld [vmem:[#allocation2 + $0x2c0] sm:$0xf]
    %v1399 = vld [vmem:[#allocation2 + $0x2c8] sm:$0xf]
    %v1400 = vld [vmem:[#allocation2 + $0x2d0] sm:$0xf]
    %v1401 = vld [vmem:[#allocation2 + $0x2d8] sm:$0xf]
    %v1402 = vld [vmem:[#allocation2 + $0x2e0] sm:$0xf]
    %v1403 = vld [vmem:[#allocation2 + $0x2e8] sm:$0xf]
    %v1404 = vld [vmem:[#allocation2 + $0x2f0] sm:$0xf]
    %v1405 = vld [vmem:[#allocation2 + $0x2f8] sm:$0xf]
    %v1406 = vld [vmem:[#allocation2 + $0x300] sm:$0xf]
    %v1407 = vld [vmem:[#allocation2 + $0x308] sm:$0xf]
    %v1408 = vld [vmem:[%s2 + $0x6] sm:$0x1]
    %v1410 = vlaneseq
    %v1411 = vshrl.u32 %v1410, 7
    %v1412 = vsub.s32 0, %v1411
    %v1413 = vrot.slane %v1408, %v1412
    %v1431 = vunpack.c.l.b16 %v1392
    %v1432 = vunpack.c.l.b16 %v1393
    %v1433 = vunpack.c.l.b16 %v1394
    %v1434 = vunpack.c.l.b16 %v1395
    %v1435 = vunpack.c.l.b16 %v1396
    %v1436 = vunpack.c.l.b16 %v1397
    %v1437 = vunpack.c.l.b16 %v1398
    %v1438 = vunpack.c.l.b16 %v1399
    %v1439 = vunpack.c.l.b16 %v1400
    %v1440 = vunpack.c.l.b16 %v1401
    %v1441 = vunpack.c.l.b16 %v1402
    %v1442 = vunpack.c.l.b16 %v1403
    %v1443 = vunpack.c.l.b16 %v1404
    %v1444 = vunpack.c.l.b16 %v1405
    %v1445 = vunpack.c.l.b16 %v1406
    %v1446 = vunpack.c.l.b16 %v1407
    %v1447 = vpack.c.b16 %v1432, %v1431
    %v1448 = vpack.c.b16 %v1434, %v1433
    %v1449 = vpack.c.b16 %v1436, %v1435
    %v1450 = vpack.c.b16 %v1438, %v1437
    %v1451 = vpack.c.b16 %v1440, %v1439
    %v1452 = vpack.c.b16 %v1442, %v1441
    %v1453 = vpack.c.b16 %v1444, %v1443
    %v1454 = vpack.c.b16 %v1446, %v1445
    %1463 = vmatprep.subr.bf16.mxu0 0
    %1464 = vmatpush1.bf16.msra.mxu0 %v1447
    %1465 = vmatprep.subr.bf16.mxu0 0
    %1466 = vmatpush1.bf16.msra.mxu0 %v1448
    %1467 = vmatprep.subr.bf16.mxu0 0
    %1468 = vmatpush1.bf16.msra.mxu0 %v1449
    %1469 = vmatprep.subr.bf16.mxu0 0
    %1470 = vmatpush1.bf16.msra.mxu0 %v1450
    %1471 = vmatprep.subr.bf16.mxu0 0
    %1472 = vmatpush1.bf16.msra.mxu0 %v1451
    %1473 = vmatprep.subr.bf16.mxu0 0
    %1474 = vmatpush1.bf16.msra.mxu0 %v1452
    %1475 = vmatprep.subr.bf16.mxu0 0
    %1476 = vmatpush1.bf16.msra.mxu0 %v1453
    %1477 = vmatprep.subr.bf16.mxu0 0
    %1478 = vmatpush1.bf16.msra.mxu0 %v1454
    %1479 = vmatprep.subr.bf16.mxu0 0
    %1480 = vmatpush1.bf16.msra.mxu0 0
    %1481 = vmatprep.subr.bf16.mxu0 0
    %1482 = vmatpush1.bf16.msra.mxu0 0
    %1483 = vmatprep.subr.bf16.mxu0 0
    %1484 = vmatpush1.bf16.msra.mxu0 0
    %1485 = vmatprep.subr.bf16.mxu0 0
    %1486 = vmatpush1.bf16.msra.mxu0 0
    %1487 = vmatprep.subr.bf16.mxu0 0
    %1488 = vmatpush1.bf16.msra.mxu0 0
    %1489 = vmatprep.subr.bf16.mxu0 0
    %1490 = vmatpush1.bf16.msra.mxu0 0
    %1491 = vmatprep.subr.bf16.mxu0 0
    %1492 = vmatpush1.bf16.msra.mxu0 0
    %1493 = vmatprep.subr.bf16.mxu0 0
    %1494 = vmatpush1.bf16.msra.mxu0 0
    %1495 = vmatprep.mubr.bf16.mxu0 0
    %1496 = vmatmul.mubr.bf16.gmra.mrb[0].mxu0 %v1379
    %v1497 = vpop.f32.mrb[0].mxu0
    %v1498 = vadd.f32 %v1413, %v1497
    %v1499 = vpop.f32.mrb[0].mxu0
    %v1500 = vpop.f32.mrb[0].mxu0
    %v1501 = vadd.f32 %v1413, %v1500
    %v1502 = vpop.f32.mrb[0].mxu0
    %1503 = vmatprep.mubr.bf16.mxu0 0
    %1504 = vmatmul.mubr.bf16.gmra.mrb[0].mxu0 %v1380
    %v1505 = vpop.f32.mrb[0].mxu0
    %v1506 = vadd.f32 %v1413, %v1505
    %v1507 = vpop.f32.mrb[0].mxu0
    %v1508 = vpop.f32.mrb[0].mxu0
    %v1509 = vadd.f32 %v1413, %v1508
    %v1510 = vpop.f32.mrb[0].mxu0
    %1511 = vmatprep.mubr.bf16.mxu0 0
    %1512 = vmatmul.mubr.bf16.gmra.mrb[0].mxu0 %v1381
    %v1513 = vpop.f32.mrb[0].mxu0
    %v1514 = vadd.f32 %v1413, %v1513
    %v1515 = vpop.f32.mrb[0].mxu0
    %v1516 = vpop.f32.mrb[0].mxu0
    %v1517 = vadd.f32 %v1413, %v1516
    %v1518 = vpop.f32.mrb[0].mxu0
    %1519 = vmatprep.mubr.bf16.mxu0 0
    %1520 = vmatmul.mubr.bf16.gmra.mrb[0].mxu0 %v1382
    %v1521 = vpop.f32.mrb[0].mxu0
    %v1522 = vadd.f32 %v1413, %v1521
    %v1523 = vpop.f32.mrb[0].mxu0
    %v1524 = vpop.f32.mrb[0].mxu0
    %v1525 = vadd.f32 %v1413, %v1524
    %v1526 = vpop.f32.mrb[0].mxu0
    %1527 = vmatprep.mubr.bf16.mxu0 0
    %1528 = vmatmul.mubr.bf16.gmra.mrb[0].mxu0 %v1383
    %v1529 = vpop.f32.mrb[0].mxu0
    %v1530 = vadd.f32 %v1413, %v1529
    %v1531 = vpop.f32.mrb[0].mxu0
    %v1532 = vpop.f32.mrb[0].mxu0
    %v1533 = vadd.f32 %v1413, %v1532
    %v1534 = vpop.f32.mrb[0].mxu0
    %1535 = vmatprep.mubr.bf16.mxu0 0
    %1536 = vmatmul.mubr.bf16.gmra.mrb[0].mxu0 %v1384
    %v1537 = vpop.f32.mrb[0].mxu0
    %v1538 = vadd.f32 %v1413, %v1537
    %v1539 = vpop.f32.mrb[0].mxu0
    %v1540 = vpop.f32.mrb[0].mxu0
    %v1541 = vadd.f32 %v1413, %v1540
    %v1542 = vpop.f32.mrb[0].mxu0
    %1543 = vmatprep.mubr.bf16.mxu0 0
    %1544 = vmatmul.mubr.bf16.gmra.mrb[0].mxu0 %v1385
    %v1545 = vpop.f32.mrb[0].mxu0
    %v1546 = vadd.f32 %v1413, %v1545
    %v1547 = vpop.f32.mrb[0].mxu0
    %v1548 = vpop.f32.mrb[0].mxu0
    %v1549 = vadd.f32 %v1413, %v1548
    %v1550 = vpop.f32.mrb[0].mxu0
    %1551 = vmatprep.mubr.bf16.mxu0 0
    %1552 = vmatmul.mubr.bf16.gmra.mrb[0].mxu0 %v1386
    %v1553 = vpop.f32.mrb[0].mxu0
    %v1554 = vadd.f32 %v1413, %v1553
    %v1555 = vpop.f32.mrb[0].mxu0
    %v1556 = vpop.f32.mrb[0].mxu0
    %v1557 = vadd.f32 %v1413, %v1556
    %v1558 = vpop.f32.mrb[0].mxu0
    %1559 = vmatprep.mubr.bf16.mxu0 0
    %1560 = vmatmul.mubr.bf16.gmra.mrb[0].mxu0 %v1387
    %v1561 = vpop.f32.mrb[0].mxu0
    %v1562 = vadd.f32 %v1413, %v1561
    %v1563 = vpop.f32.mrb[0].mxu0
    %v1564 = vpop.f32.mrb[0].mxu0
    %v1565 = vadd.f32 %v1413, %v1564
    %v1566 = vpop.f32.mrb[0].mxu0
    %1567 = vmatprep.mubr.bf16.mxu0 0
    %1568 = vmatmul.mubr.bf16.gmra.mrb[0].mxu0 %v1388
    %v1569 = vpop.f32.mrb[0].mxu0
    %v1570 = vadd.f32 %v1413, %v1569
    %v1571 = vpop.f32.mrb[0].mxu0
    %v1572 = vpop.f32.mrb[0].mxu0
    %v1573 = vadd.f32 %v1413, %v1572
    %v1574 = vpop.f32.mrb[0].mxu0
    %1575 = vmatprep.mubr.bf16.mxu0 0
    %1576 = vmatmul.mubr.bf16.gmra.mrb[0].mxu0 %v1389
    %v1577 = vpop.f32.mrb[0].mxu0
    %v1578 = vadd.f32 %v1413, %v1577
    %v1579 = vpop.f32.mrb[0].mxu0
    %v1580 = vpop.f32.mrb[0].mxu0
    %v1581 = vadd.f32 %v1413, %v1580
    %v1582 = vpop.f32.mrb[0].mxu0
    %1583 = vmatprep.mubr.bf16.mxu0 0
    %1584 = vmatmul.mubr.bf16.gmra.mrb[0].mxu0 %v1390
    %v1585 = vpop.f32.mrb[0].mxu0
    %v1586 = vadd.f32 %v1413, %v1585
    %v1587 = vpop.f32.mrb[0].mxu0
    %v1588 = vpop.f32.mrb[0].mxu0
    %v1589 = vadd.f32 %v1413, %v1588
    %v1590 = vpop.f32.mrb[0].mxu0
    %1591 = vmatprep.mubr.bf16.mxu0 0
    %1592 = vmatmul.mubr.bf16.gmra.mrb[0].mxu0 %v1391
    %v1593 = vpop.f32.mrb[0].mxu0
    %v1594 = vadd.f32 %v1413, %v1593
    %v1595 = vpop.f32.mrb[0].mxu0
    %v1596 = vpop.f32.mrb[0].mxu0
    %v1597 = vpop.f32.mrb[0].mxu0
    %1598 = vdwg.mxu0
    %1599 = vst [vmem:[#allocation5] sm:$0xff] %v1498
    %1600 = vst [vmem:[#allocation5 + $0x8] sm:$0xff] %v1501
    %1601 = vst [vmem:[#allocation5 + $0x10] sm:$0xff] %v1506
    %1602 = vst [vmem:[#allocation5 + $0x18] sm:$0xff] %v1509
    %1603 = vst [vmem:[#allocation5 + $0x20] sm:$0xff] %v1514
    %1604 = vst [vmem:[#allocation5 + $0x28] sm:$0xff] %v1517
    %1605 = vst [vmem:[#allocation5 + $0x30] sm:$0xff] %v1522
    %1606 = vst [vmem:[#allocation5 + $0x38] sm:$0xff] %v1525
    %1607 = vst [vmem:[#allocation5 + $0x40] sm:$0xff] %v1530
    %1608 = vst [vmem:[#allocation5 + $0x48] sm:$0xff] %v1533
    %1609 = vst [vmem:[#allocation5 + $0x50] sm:$0xff] %v1538
    %1610 = vst [vmem:[#allocation5 + $0x58] sm:$0xff] %v1541
    %1611 = vst [vmem:[#allocation5 + $0x60] sm:$0xff] %v1546
    %1612 = vst [vmem:[#allocation5 + $0x68] sm:$0xff] %v1549
    %1613 = vst [vmem:[#allocation5 + $0x70] sm:$0xff] %v1554
    %1614 = vst [vmem:[#allocation5 + $0x78] sm:$0xff] %v1557
    %1615 = vst [vmem:[#allocation5 + $0x80] sm:$0xff] %v1562
    %1616 = vst [vmem:[#allocation5 + $0x88] sm:$0xff] %v1565
    %1617 = vst [vmem:[#allocation5 + $0x90] sm:$0xff] %v1570
    %1618 = vst [vmem:[#allocation5 + $0x98] sm:$0xff] %v1573
    %1619 = vst [vmem:[#allocation5 + $0xa0] sm:$0xff] %v1578
    %1620 = vst [vmem:[#allocation5 + $0xa8] sm:$0xff] %v1581
    %1621 = vst [vmem:[#allocation5 + $0xb0] sm:$0xff] %v1586
    %1622 = vst [vmem:[#allocation5 + $0xb8] sm:$0xff] %v1589
    %1623 = vst [vmem:[#allocation5 + $0xc0] sm:$0xff] %v1594
    // Predicated region
    $region18: #{tpu_custom_call.1} parent=1 // pred_check
      _
    $region19: #{tpu_custom_call.1} parent=1 // pred_check_branch
      %1625 = sbr.rel (0) target = $region21
    $region20: #{tpu_custom_call.1} parent=1 // pred_region
      %s1627 = ssub.s32 3200, 3200
      %1628 = vsyncadd [#allocation4], %s1627
      %s1629 = sshll.u32 [#allocation5], 4
      %s1630 = int_to_ptr.vmem [resolvable:$true] %s1629
      %1635 = dma.vmem_to_hbm [thread:$0]  %s1630, 3200, %s3, [#allocation4], 128, 128, 8
    $region21: #{tpu_custom_call.1} parent=1 // pred_fallthru
      _
    // Predicated region
    $region22: #{tpu_custom_call.1} parent=1 // pred_check
      _
    $region23: #{tpu_custom_call.1} parent=1 // pred_check_branch
      %1637 = sbr.rel (0) target = $region25
    $region24: #{tpu_custom_call.1} parent=1 // pred_region
      %1638 = dma.done [#allocation4], 3200
    $region25: #{tpu_custom_call.1} parent=1 // pred_fallthru
      _
    %1639 = vsyncpa [#allocation3], 1
    %1640 = vsyncpa [#allocation4], 1

</llo_original>
